<compile_context>
chip_gen: v6e
topology: v6e:2x2x1
jax: 0.10.0
libtpu: 0.0.40
codegen_flags: <defaults>
</compile_context>

<pallas_src>
import functools

import jax
import jax.numpy as jnp
from jax import lax
from jax.experimental import pallas as pl
from jax.experimental.pallas import tpu as pltpu


def _conv_bn_lrelu_kernel(x_ref, w_ref, bias_ref, o_ref, *,
                          k, s, d, th, w_out, c_in, tc, slope):
    # x_ref:    (1, Hp, Wp, Cin)   full padded image (resident across row/cout tiles)
    # w_ref:    (k, k*Cin, TC)     BN-scale-folded weights, kw merged into contraction
    # bias_ref: (1, TC)            folded BN bias (f32, includes conv bias)
    # o_ref:    (1, TH, Wout, TC)
    win_h = (th - 1) * s + (k - 1) * d + 1
    h_base = pl.multiple_of(pl.program_id(1) * (th * s), th * s)
    x_win = x_ref[0, pl.ds(h_base, win_h), :, :]          # (win_h, Wp, Cin)

    m = th * w_out
    acc = jnp.zeros((m, tc), jnp.float32)
    for kh in range(k):                                   # static unrolled tap loop
        parts = []
        for kw in range(k):
            # TODO(synk): for stride>1 layers, pre-space-to-depth in the wrapper
            # (or strided DMA) instead of this in-kernel strided sublane slice.
            sl = lax.slice(
                x_win,
                (kh * d, kw * d, 0),
                (kh * d + (th - 1) * s + 1,
                 kw * d + (w_out - 1) * s + 1,
                 c_in),
                (s, s, 1))                                # (TH, Wout, Cin)
            parts.append(sl.reshape(m, c_in))
        lhs = parts[0] if k == 1 else jnp.concatenate(parts, axis=-1)  # (M, k*Cin)
        acc = acc + jnp.dot(lhs, w_ref[kh],               # (k*Cin, TC) -> MXU
                            preferred_element_type=jnp.float32)

    y = acc + bias_ref[...]                               # (M, TC) + (1, TC)
    y = jnp.where(y > 0, y, slope * y)                    # LeakyReLU(0.1)
    o_ref[0] = y.reshape(th, w_out, tc).astype(o_ref.dtype)


def conv_bn_leakyrelu(x_nchw, weight_oihw, conv_bias, gamma, beta,
                      running_mean, running_var, *, k=1, p=0, s=1, d=1,
                      eps=1e-5, slope=0.1, compute_dtype=jnp.bfloat16,
                      tc=128, target_m=512):
    """PyTorch Conv2d(c1,c2,k,p,s,d) + BatchNorm2d(c2, eval) + LeakyReLU(0.1)."""
    n, c1, h, w = x_nchw.shape
    c2 = weight_oihw.shape[0]

    # Fold BN (eval) into per-channel scale / bias; fold the scale into the
    # conv weights so the kernel only needs a bias add after accumulation.
    scale = gamma / jnp.sqrt(running_var + eps)                   # (c2,)
    bias = beta + scale * (conv_bias - running_mean)              # (c2,)

    w_hwio = jnp.transpose(weight_oihw, (2, 3, 1, 0)) * scale     # (k,k,c1,c2)

    # Pad Cout to a multiple of 128 -> lane-dense output stores.
    cout_pad = ((c2 + tc - 1) // tc) * tc
    w_pad = jnp.pad(w_hwio, ((0, 0), (0, 0), (0, 0), (0, cout_pad - c2)))
    w_kk = w_pad.reshape(k, k * c1, cout_pad).astype(compute_dtype)
    bias_pad = jnp.pad(bias, (0, cout_pad - c2)).reshape(1, cout_pad)
    bias_pad = bias_pad.astype(jnp.float32)

    # NCHW -> NHWC, pad spatial dims, cast to bf16 compute dtype.
    x_nhwc = jnp.transpose(x_nchw, (0, 2, 3, 1))
    x_padded = jnp.pad(x_nhwc, ((0, 0), (p, p), (p, p), (0, 0)))
    x_padded = x_padded.astype(compute_dtype)
    hp, wp = h + 2 * p, w + 2 * p
    h_out = (hp - (k - 1) * d - 1) // s + 1
    w_out = (wp - (k - 1) * d - 1) // s + 1

    # Output-row tile: target ~target_m rows in the flattened M dim, must
    # divide Hout exactly (avoids OOB halo reads on the last tile).
    th = max(1, min(h_out, max(1, target_m // max(1, w_out))))
    while h_out % th:
        th -= 1
    n_h = h_out // th
    n_c = cout_pad // tc

    kernel = functools.partial(
        _conv_bn_lrelu_kernel, k=k, s=s, d=d, th=th, w_out=w_out,
        c_in=c1, tc=tc, slope=slope)

    out_nhwc = pl.pallas_call(
        kernel,
        out_shape=jax.ShapeDtypeStruct((n, h_out, w_out, cout_pad),
                                       x_nchw.dtype),
        grid_spec=pltpu.PrefetchScalarGridSpec(
            num_scalar_prefetch=0,
            grid=(n, n_h, n_c),
            in_specs=[
                # Whole padded image per batch element; index_map ignores the
                # row / cout axes so the block stays resident (DMA'd once per n).
                pl.BlockSpec((1, hp, wp, c1), lambda b, hi, ci: (b, 0, 0, 0)),
                pl.BlockSpec((k, k * c1, tc), lambda b, hi, ci: (0, 0, ci)),
                pl.BlockSpec((1, tc), lambda b, hi, ci: (0, ci)),
            ],
            out_specs=pl.BlockSpec((1, th, w_out, tc),
                                   lambda b, hi, ci: (b, hi, 0, ci)),
        ),
        compiler_params=pltpu.CompilerParams(
            dimension_semantics=("parallel", "parallel", "arbitrary"),
            vmem_limit_bytes=32 * 1024 * 1024),
    )(x_padded, w_kk, bias_pad)

    out_nhwc = out_nhwc[..., :c2]                       # drop lane padding
    return jnp.transpose(out_nhwc, (0, 3, 1, 2))        # back to NCHW


def _reference(x, weight, conv_bias, gamma, beta, running_mean, running_var,
               *, k, p, s, d, eps=1e-5, slope=0.1):
    y = lax.conv_general_dilated(
        x, weight, window_strides=(s, s), padding=((p, p), (p, p)),
        rhs_dilation=(d, d), dimension_numbers=("NCHW", "OIHW", "NCHW"))
    y = y + conv_bias.reshape(1, -1, 1, 1)
    y = (y - running_mean.reshape(1, -1, 1, 1)) / jnp.sqrt(
        running_var.reshape(1, -1, 1, 1) + eps)
    y = y * gamma.reshape(1, -1, 1, 1) + beta.reshape(1, -1, 1, 1)
    return jnp.where(y > 0, y, slope * y)


if __name__ == "__main__":
    # Module config: Conv_BN_LeakyReLU(c1=4, c2=8, k=3, p=1, s=1, d=1)
    N, C1, H, W = 2, 4, 16, 16
    C2, K, P, S, D = 8, 3, 1, 1, 1

    key = jax.random.PRNGKey(0)
    kx, kw, kb, kg, kbeta, km, kv = jax.random.split(key, 7)

    x = jax.random.normal(kx, (N, C1, H, W), jnp.float32)
    weight = jax.random.normal(kw, (C2, C1, K, K), jnp.float32) * 0.1
    conv_bias = jax.random.normal(kb, (C2,), jnp.float32) * 0.1
    gamma = jax.random.uniform(kg, (C2,), jnp.float32, 0.5, 1.5)
    beta = jax.random.normal(kbeta, (C2,), jnp.float32) * 0.1
    running_mean = jax.random.normal(km, (C2,), jnp.float32) * 0.1
    running_var = jax.random.uniform(kv, (C2,), jnp.float32, 0.5, 1.5)

    out = conv_bn_leakyrelu(x, weight, conv_bias, gamma, beta,
                            running_mean, running_var,
                            k=K, p=P, s=S, d=D)
    out = jax.block_until_ready(out)

    ref = _reference(x, weight, conv_bias, gamma, beta, running_mean,
                     running_var, k=K, p=P, s=S, d=D)
    assert out.shape == (N, C2, H, W), out.shape
    # bf16 inputs + f32 accumulation -> loosen tolerance vs the f32 reference.
    assert jnp.allclose(out, ref, atol=5e-2, rtol=5e-2), (
        float(jnp.max(jnp.abs(out - ref))))

    print("KERNEL_OK")
</pallas_src>

<mosaic_0001>
module attributes {stable_mosaic.version = 11 : i64} {
  func.func @_conv_bn_lrelu_kernel(%arg0: i32, %arg1: i32, %arg2: i32, %arg3: memref<1x18x18x4xbf16, #tpu.memory_space<vmem>>, %arg4: memref<3x12x128xbf16, #tpu.memory_space<vmem>>, %arg5: memref<1x128xf32, #tpu.memory_space<vmem>>, %arg6: memref<1x16x16x128xf32, #tpu.memory_space<vmem>>) attributes {dimension_semantics = [#tpu.dimension_semantics<parallel>, #tpu.dimension_semantics<parallel>, #tpu.dimension_semantics<arbitrary>], iteration_bounds = array<i64: 2, 1, 1>, scalar_prefetch = 0 : i64, scratch_operands = 0 : i64, tpu.core_type = #tpu.core_type<tc>, window_params = [{transform_indices = @transform_0, window_bounds = array<i64: 1, 18, 18, 4>}, {transform_indices = @transform_1, window_bounds = array<i64: 3, 12, 128>}, {transform_indices = @transform_2, window_bounds = array<i64: 1, 128>}, {transform_indices = @transform_3, window_bounds = array<i64: 1, 16, 16, 128>}]} {
    %c16_i32 = arith.constant 16 : i32
    %0 = arith.muli %arg1, %c16_i32 : i32
    %1 = tpu.assume_multiple %0, 16 : i32
    %c0 = arith.constant 0 : index
    %2 = arith.index_cast %1 : i32 to index
    %c0_0 = arith.constant 0 : index
    %c0_1 = arith.constant 0 : index
    %3 = vector.load %arg3[%c0, %2, %c0_0, %c0_1] : memref<1x18x18x4xbf16, #tpu.memory_space<vmem>>, vector<1x18x18x4xbf16>
    %4 = vector.shape_cast %3 : vector<1x18x18x4xbf16> to vector<18x18x4xbf16>
    %cst = arith.constant 0.000000e+00 : f32
    %5 = vector.broadcast %cst : f32 to vector<256x128xf32>
    %6 = vector.extract_strided_slice %4 {offsets = [0, 0, 0], sizes = [16, 16, 4], strides = [1, 1, 1]} : vector<18x18x4xbf16> to vector<16x16x4xbf16>
    %7 = vector.shape_cast %6 : vector<16x16x4xbf16> to vector<256x4xbf16>
    %8 = vector.extract_strided_slice %4 {offsets = [0, 1, 0], sizes = [16, 16, 4], strides = [1, 1, 1]} : vector<18x18x4xbf16> to vector<16x16x4xbf16>
    %9 = vector.shape_cast %8 : vector<16x16x4xbf16> to vector<256x4xbf16>
    %10 = vector.extract_strided_slice %4 {offsets = [0, 2, 0], sizes = [16, 16, 4], strides = [1, 1, 1]} : vector<18x18x4xbf16> to vector<16x16x4xbf16>
    %11 = vector.shape_cast %10 : vector<16x16x4xbf16> to vector<256x4xbf16>
    %12 = tpu.concatenate %7, %9, %11 in 1 : vector<256x4xbf16>, vector<256x4xbf16>, vector<256x4xbf16> -> vector<256x12xbf16>
    %c0_2 = arith.constant 0 : index
    %c0_3 = arith.constant 0 : index
    %c0_4 = arith.constant 0 : index
    %13 = vector.load %arg4[%c0_2, %c0_3, %c0_4] : memref<3x12x128xbf16, #tpu.memory_space<vmem>>, vector<1x12x128xbf16>
    %14 = vector.shape_cast %13 : vector<1x12x128xbf16> to vector<12x128xbf16>
    %cst_5 = arith.constant dense<0.000000e+00> : vector<256x128xf32>
    %15 = tpu.matmul %12, %14, %cst_5 {dimension_numbers = #tpu.dot_dimension_numbers<[1], [0], [0], [1], [0, 0, 1, 1], [], []>} : vector<256x12xbf16>, vector<12x128xbf16>, vector<256x128xf32> -> vector<256x128xf32>
    %16 = arith.addf %5, %15 : vector<256x128xf32>
    %17 = vector.extract_strided_slice %4 {offsets = [1, 0, 0], sizes = [16, 16, 4], strides = [1, 1, 1]} : vector<18x18x4xbf16> to vector<16x16x4xbf16>
    %18 = vector.shape_cast %17 : vector<16x16x4xbf16> to vector<256x4xbf16>
    %19 = vector.extract_strided_slice %4 {offsets = [1, 1, 0], sizes = [16, 16, 4], strides = [1, 1, 1]} : vector<18x18x4xbf16> to vector<16x16x4xbf16>
    %20 = vector.shape_cast %19 : vector<16x16x4xbf16> to vector<256x4xbf16>
    %21 = vector.extract_strided_slice %4 {offsets = [1, 2, 0], sizes = [16, 16, 4], strides = [1, 1, 1]} : vector<18x18x4xbf16> to vector<16x16x4xbf16>
    %22 = vector.shape_cast %21 : vector<16x16x4xbf16> to vector<256x4xbf16>
    %23 = tpu.concatenate %18, %20, %22 in 1 : vector<256x4xbf16>, vector<256x4xbf16>, vector<256x4xbf16> -> vector<256x12xbf16>
    %c1 = arith.constant 1 : index
    %c0_6 = arith.constant 0 : index
    %c0_7 = arith.constant 0 : index
    %24 = vector.load %arg4[%c1, %c0_6, %c0_7] : memref<3x12x128xbf16, #tpu.memory_space<vmem>>, vector<1x12x128xbf16>
    %25 = vector.shape_cast %24 : vector<1x12x128xbf16> to vector<12x128xbf16>
    %cst_8 = arith.constant dense<0.000000e+00> : vector<256x128xf32>
    %26 = tpu.matmul %23, %25, %cst_8 {dimension_numbers = #tpu.dot_dimension_numbers<[1], [0], [0], [1], [0, 0, 1, 1], [], []>} : vector<256x12xbf16>, vector<12x128xbf16>, vector<256x128xf32> -> vector<256x128xf32>
    %27 = arith.addf %16, %26 : vector<256x128xf32>
    %28 = vector.extract_strided_slice %4 {offsets = [2, 0, 0], sizes = [16, 16, 4], strides = [1, 1, 1]} : vector<18x18x4xbf16> to vector<16x16x4xbf16>
    %29 = vector.shape_cast %28 : vector<16x16x4xbf16> to vector<256x4xbf16>
    %30 = vector.extract_strided_slice %4 {offsets = [2, 1, 0], sizes = [16, 16, 4], strides = [1, 1, 1]} : vector<18x18x4xbf16> to vector<16x16x4xbf16>
    %31 = vector.shape_cast %30 : vector<16x16x4xbf16> to vector<256x4xbf16>
    %32 = vector.extract_strided_slice %4 {offsets = [2, 2, 0], sizes = [16, 16, 4], strides = [1, 1, 1]} : vector<18x18x4xbf16> to vector<16x16x4xbf16>
    %33 = vector.shape_cast %32 : vector<16x16x4xbf16> to vector<256x4xbf16>
    %34 = tpu.concatenate %29, %31, %33 in 1 : vector<256x4xbf16>, vector<256x4xbf16>, vector<256x4xbf16> -> vector<256x12xbf16>
    %c2 = arith.constant 2 : index
    %c0_9 = arith.constant 0 : index
    %c0_10 = arith.constant 0 : index
    %35 = vector.load %arg4[%c2, %c0_9, %c0_10] : memref<3x12x128xbf16, #tpu.memory_space<vmem>>, vector<1x12x128xbf16>
    %36 = vector.shape_cast %35 : vector<1x12x128xbf16> to vector<12x128xbf16>
    %cst_11 = arith.constant dense<0.000000e+00> : vector<256x128xf32>
    %37 = tpu.matmul %34, %36, %cst_11 {dimension_numbers = #tpu.dot_dimension_numbers<[1], [0], [0], [1], [0, 0, 1, 1], [], []>} : vector<256x12xbf16>, vector<12x128xbf16>, vector<256x128xf32> -> vector<256x128xf32>
    %38 = arith.addf %27, %37 : vector<256x128xf32>
    %c0_12 = arith.constant 0 : index
    %c0_13 = arith.constant 0 : index
    %39 = vector.load %arg5[%c0_12, %c0_13] : memref<1x128xf32, #tpu.memory_space<vmem>>, vector<1x128xf32>
    %40 = vector.broadcast %39 : vector<1x128xf32> to vector<256x128xf32>
    %41 = arith.addf %38, %40 : vector<256x128xf32>
    %cst_14 = arith.constant 0.000000e+00 : f32
    %42 = vector.broadcast %cst_14 : f32 to vector<256x128xf32>
    %43 = arith.cmpf ogt, %41, %42 : vector<256x128xf32>
    %cst_15 = arith.constant 1.000000e-01 : f32
    %44 = vector.broadcast %cst_15 : f32 to vector<256x128xf32>
    %45 = arith.mulf %44, %41 : vector<256x128xf32>
    %46 = arith.select %43, %41, %45 : vector<256x128xi1>, vector<256x128xf32>
    %47 = vector.shape_cast %46 : vector<256x128xf32> to vector<16x16x128xf32>
    %c0_16 = arith.constant 0 : index
    %c0_17 = arith.constant 0 : index
    %c0_18 = arith.constant 0 : index
    %c0_19 = arith.constant 0 : index
    %48 = vector.load %arg6[%c0_16, %c0_17, %c0_18, %c0_19] : memref<1x16x16x128xf32, #tpu.memory_space<vmem>>, vector<1x16x16x128xf32>
    %49 = vector.shape_cast %48 : vector<1x16x16x128xf32> to vector<16x16x128xf32>
    %50 = vector.shape_cast %47 : vector<16x16x128xf32> to vector<1x16x16x128xf32>
    tpu.vector_store %arg6[%c0_16, %c0_17, %c0_18, %c0_19], %50 {strides = array<i32>} : memref<1x16x16x128xf32, #tpu.memory_space<vmem>>, vector<1x16x16x128xf32>,
    return
  }
  func.func @transform_0(%arg0: i32, %arg1: i32, %arg2: i32) -> (i32, i32, i32, i32) {
    %c0_i32 = arith.constant 0 : i32
    %c0_i32_0 = arith.constant 0 : i32
    %c0_i32_1 = arith.constant 0 : i32
    %c0_i32_2 = arith.constant 0 : i32
    return %arg0, %c0_i32, %c0_i32_0, %c0_i32_1 : i32, i32, i32, i32
  }
  func.func @transform_1(%arg0: i32, %arg1: i32, %arg2: i32) -> (i32, i32, i32) {
    %c0_i32 = arith.constant 0 : i32
    %c0_i32_0 = arith.constant 0 : i32
    %c0_i32_1 = arith.constant 0 : i32
    return %c0_i32, %c0_i32_0, %arg2 : i32, i32, i32
  }
  func.func @transform_2(%arg0: i32, %arg1: i32, %arg2: i32) -> (i32, i32) {
    %c0_i32 = arith.constant 0 : i32
    %c0_i32_0 = arith.constant 0 : i32
    return %c0_i32, %arg2 : i32, i32
  }
  func.func @transform_3(%arg0: i32, %arg1: i32, %arg2: i32) -> (i32, i32, i32, i32) {
    %c0_i32 = arith.constant 0 : i32
    %c0_i32_0 = arith.constant 0 : i32
    return %arg0, %arg1, %c0_i32, %arg2 : i32, i32, i32, i32
  }
}

</mosaic_0001>

<llo_original>
// kernel: tpu_custom_call.1
$region0: #{tpu_custom_call.1}
  #allocation0 [shape = 'u32[]', space=smem, size = 0x4, offset = 0x4, fixed_abs, tag = 'smem constant byte address 0x4 - core index']
  #allocation1 [shape = 'u32[144,128]{1,0:T(1,128)}', space=vmem, size = 0x12000, scoped, tag = 'internal scratch']
  %s0 = inlined_call_operand.vmem [shape: bf16[2,18,18,4], index: 0, kind: input, shape index: {}]
  %s1 = inlined_call_operand.vmem [shape: bf16[3,12,128], index: 1, kind: input, shape index: {}]
  %s2 = inlined_call_operand.vmem [shape: f32[1,128], index: 2, kind: input, shape index: {}]
  %s3 = inlined_call_operand.hbm [shape: f32[2,16,16,128], index: 3, kind: output, shape index: {}]
  %s4 = sld [smem:[#allocation0]]
  $region45: #{tpu_custom_call.1} parent=0
    _
  %s6 = ssub.s32 1, %s4
  %s7 = scalar_select 0, %s6, %s4
  $region1: #{tpu_custom_call.1} parent=0
    #allocation2 [shape = 'u8[262144]{0}', space=vmem, size = 0x40000, scoped, tag = 'output window, operand 0']
    #allocation3 [shape = 's32[2]{0}', space=sflag, size = 0x8, scoped, tag = 'scoped memory for tpu_custom_call.1']
    %8 = vsyncpa [#allocation3], 0
    %s9 = scalar_lea.sflag [#allocation3], 1
    %10 = vsyncpa %s9, 0
    loop: start=0, step=1, limit=4
    $region2: #{tpu_custom_call.1} parent=1 // loop_pre_header
      _
    $region3: #{tpu_custom_call.1} parent=1 // loop_header
      %s12 = sphi 0, %s16
      %p13 = scmp.ge.s32.totalorder %s12, 4
      %s19 = sphi 0, %s38
      %s20 = sphi 0, %s34
      %s21 = sphi 0, %s30
      %s22 = sphi 0, %s19
      %s23 = sphi 0, %s20
      %s24 = sphi 0, %s21
      %s25 = sphi 0, %s22
      %s26 = sphi 0, %s23
      %s27 = sphi 0, %s24
      %s41 = sphi 0, %s43
      %s44 = sphi 0, %s41
      %s45 = sphi 0, %s44
      %s61 = sphi 0, %s45
      %s67 = sphi 0, %s69
      %s70 = sphi 0, %s67
      %s71 = sphi 0, %s70
      %s87 = sphi 0, %s71
      %s93 = sphi 0, %s95
      %s96 = sphi 0, %s93
      %s97 = sphi 0, %s96
      %s113 = sphi 0, %s97
      %s123 = sphi 0, %s125
      %s126 = sphi 0, %s123
      %s127 = sphi 0, %s126
      %s143 = sphi 0, %s127
    $region4: #{tpu_custom_call.1} parent=1 // loop_header_branch
      %15 = sbr.rel (%p13) target = $region8
    $region5: #{tpu_custom_call.1} parent=1 // loop_body
      %s17 = ssub.s32 %s12, 1
      %s18 = ssub.s32 %s12, 2
      %s28 = sadd.s32 1, %s21
      %p29 = scmp.ge.s32.totalorder %s28, 1
      %s30 = scalar_select %p29, 0, %s28
      %s31 = sadd.s32 1, %s20
      %s32 = scalar_select %p29, %s31, %s20
      %p33 = scmp.ge.s32.totalorder %s32, 1
      %s34 = scalar_select %p33, 0, %s32
      %s35 = sadd.s32 1, %s19
      %s36 = scalar_select %p33, %s35, %s19
      %p37 = scmp.ge.s32.totalorder %s36, 2
      %s38 = scalar_select %p37, 0, %s36
      %s39 = ssub.s32 %s19, %s38
      %p40 = scmp.eq.s32.totalorder %s39, 0
      %s42 = sadd.s32 %s41, 1
      %s43 = scalar_select %p40, %s41, %s42
      %p46 = pneg %p40
      %p47 = scmp.eq.s32.totalorder %s12, 1
      %p48 = por %p46, %p47
      %p49 = scmp.ne.s32.totalorder %s41, %s44
      %p50 = scmp.eq.s32.totalorder %s12, 0
      %p51 = por %p49, %p50
      %p52 = scmp.ne.s32.totalorder %s41, %s44
      %p53 = scmp.eq.s32.totalorder %s17, 1
      %p54 = por %p52, %p53
      %p55 = scmp.ne.s32.totalorder %s44, %s45
      %p56 = scmp.eq.s32.totalorder %s17, 0
      %p57 = por %p55, %p56
      %p58 = scmp.ne.s32.totalorder %s44, %s45
      %p59 = scmp.eq.s32.totalorder %s18, 1
      %p60 = por %p58, %p59
      %p62 = scmp.ne.s32.totalorder %s45, %s61
      %p63 = scmp.eq.s32.totalorder %s18, 0
      %p64 = por %p62, %p63
      %s65 = ssub.s32 %s21, %s30
      %p66 = scmp.eq.s32.totalorder %s65, 0
      %s68 = sadd.s32 %s67, 1
      %s69 = scalar_select %p66, %s67, %s68
      %p72 = pneg %p66
      %p73 = scmp.eq.s32.totalorder %s12, 1
      %p74 = por %p72, %p73
      %p75 = scmp.ne.s32.totalorder %s67, %s70
      %p76 = scmp.eq.s32.totalorder %s12, 0
      %p77 = por %p75, %p76
      %p78 = scmp.ne.s32.totalorder %s67, %s70
      %p79 = scmp.eq.s32.totalorder %s17, 1
      %p80 = por %p78, %p79
      %p81 = scmp.ne.s32.totalorder %s70, %s71
      %p82 = scmp.eq.s32.totalorder %s17, 0
      %p83 = por %p81, %p82
      %p84 = scmp.ne.s32.totalorder %s70, %s71
      %p85 = scmp.eq.s32.totalorder %s18, 1
      %p86 = por %p84, %p85
      %p88 = scmp.ne.s32.totalorder %s71, %s87
      %p89 = scmp.eq.s32.totalorder %s18, 0
      %p90 = por %p88, %p89
      %s91 = ssub.s32 %s21, %s30
      %p92 = scmp.eq.s32.totalorder %s91, 0
      %s94 = sadd.s32 %s93, 1
      %s95 = scalar_select %p92, %s93, %s94
      %p98 = pneg %p92
      %p99 = scmp.eq.s32.totalorder %s12, 1
      %p100 = por %p98, %p99
      %p101 = scmp.ne.s32.totalorder %s93, %s96
      %p102 = scmp.eq.s32.totalorder %s12, 0
      %p103 = por %p101, %p102
      %p104 = scmp.ne.s32.totalorder %s93, %s96
      %p105 = scmp.eq.s32.totalorder %s17, 1
      %p106 = por %p104, %p105
      %p107 = scmp.ne.s32.totalorder %s96, %s97
      %p108 = scmp.eq.s32.totalorder %s17, 0
      %p109 = por %p107, %p108
      %p110 = scmp.ne.s32.totalorder %s96, %s97
      %p111 = scmp.eq.s32.totalorder %s18, 1
      %p112 = por %p110, %p111
      %p114 = scmp.ne.s32.totalorder %s97, %s113
      %p115 = scmp.eq.s32.totalorder %s18, 0
      %p116 = por %p114, %p115
      %s117 = ssub.s32 %s19, %s38
      %s118 = ssub.s32 %s20, %s34
      %s119 = sor.u32 %s117, %s118
      %s120 = ssub.s32 %s21, %s30
      %s121 = sor.u32 %s119, %s120
      %p122 = scmp.eq.s32.totalorder %s121, 0
      %s124 = sadd.s32 %s123, 1
      %s125 = scalar_select %p122, %s123, %s124
      %p128 = pneg %p122
      %p129 = scmp.eq.s32.totalorder %s12, 1
      %p130 = por %p128, %p129
      %p131 = scmp.ne.s32.totalorder %s123, %s126
      %p132 = scmp.eq.s32.totalorder %s12, 0
      %p133 = por %p131, %p132
      %p134 = scmp.ne.s32.totalorder %s123, %s126
      %p135 = scmp.eq.s32.totalorder %s17, 1
      %p136 = por %p134, %p135
      %p137 = scmp.ne.s32.totalorder %s126, %s127
      %p138 = scmp.eq.s32.totalorder %s17, 0
      %p139 = por %p137, %p138
      %p140 = scmp.ne.s32.totalorder %s126, %s127
      %p141 = scmp.eq.s32.totalorder %s18, 1
      %p142 = por %p140, %p141
      %p144 = scmp.ne.s32.totalorder %s127, %s143
      %p145 = scmp.eq.s32.totalorder %s18, 0
      %p146 = por %p144, %p145
      %p147 = scmp.le.s32.totalorder 1, %s12
      %p148 = scmp.lt.s32.totalorder %s12, 3
      %p149 = pnand %p147, %p148
      %p150 = pneg %p149
      // Predicated region
      $region9: #{tpu_custom_call.1} parent=5 // pred_check
        _
      $region10: #{tpu_custom_call.1} parent=5 // pred_check_branch
        %152 = sbr.rel (%p149) target = $region12
      $region11: #{tpu_custom_call.1} parent=5 // pred_region
        %s153 = ssub.s32 %s12, 1
        // Predicated region
        $region13: #{tpu_custom_call.1} parent=11 // pred_check
          %p154 = pneg %p83
        $region14: #{tpu_custom_call.1} parent=11 // pred_check_branch
          %156 = sbr.rel (%p154) target = $region16
        $region15: #{tpu_custom_call.1} parent=11 // pred_region
          %p157 = scmp.lt.s32.totalorder %s24, 0
          %s158 = scalar_select %p157, %s24, 0
          %s159 = smul.addr %s158, 4
          %s160 = scalar_lea.vmem %s1, %s159
        $region16: #{tpu_custom_call.1} parent=11 // pred_fallthru
          _
        // Predicated region
        $region17: #{tpu_custom_call.1} parent=11 // pred_check
          %p161 = pneg %p109
        $region18: #{tpu_custom_call.1} parent=11 // pred_check_branch
          %163 = sbr.rel (%p161) target = $region20
        $region19: #{tpu_custom_call.1} parent=11 // pred_region
          %p164 = scmp.lt.s32.totalorder %s24, 0
          %s165 = scalar_select %p164, %s24, 0
          %s166 = scalar_lea.vmem %s2, %s165
        $region20: #{tpu_custom_call.1} parent=11 // pred_fallthru
          _
      $region12: #{tpu_custom_call.1} parent=5 // pred_fallthru
        _
      %p167 = scmp.lt.s32.totalorder %s12, 2
      // Predicated region
      $region21: #{tpu_custom_call.1} parent=5 // pred_check
        %p168 = pneg %p167
      $region22: #{tpu_custom_call.1} parent=5 // pred_check_branch
        %170 = sbr.rel (%p168) target = $region24
      $region23: #{tpu_custom_call.1} parent=5 // pred_region
        // Predicated region
        $region25: #{tpu_custom_call.1} parent=23 // pred_check
          %p171 = pneg %p51
        $region26: #{tpu_custom_call.1} parent=23 // pred_check_branch
          %173 = sbr.rel (%p171) target = $region28
        $region27: #{tpu_custom_call.1} parent=23 // pred_region
          %p174 = scmp.lt.s32.totalorder %s19, 1
          %s175 = scalar_select %p174, %s19, 1
          %s176 = smul.addr %s175, 54
          %s177 = smul.addr %s176, 4
          %s178 = scalar_lea.vmem %s0, %s177
        $region28: #{tpu_custom_call.1} parent=23 // pred_fallthru
          _
      $region24: #{tpu_custom_call.1} parent=5 // pred_fallthru
        _
      %p179 = scmp.le.s32.totalorder 1, %s12
      %p180 = scmp.lt.s32.totalorder %s12, 3
      %p181 = pnand %p179, %p180
      %p182 = pneg %p181
      // Predicated region
      $region29: #{tpu_custom_call.1} parent=5 // pred_check
        _
      $region30: #{tpu_custom_call.1} parent=5 // pred_check_branch
        %184 = sbr.rel (%p181) target = $region32
      $region31: #{tpu_custom_call.1} parent=5 // pred_region
        %s185 = ssub.s32 %s12, 1
        %p186 = scmp.lt.s32.totalorder %s22, 1
        %s187 = scalar_select %p186, %s22, 1
        %s188 = smul.addr %s187, 54
        %s189 = smul.addr %s188, 4
        %s190 = scalar_lea.vmem %s0, %s189
        %p191 = pneg %p57
        %p192 = pneg %p54
        %p193 = scmp.lt.s32.totalorder %s24, 0
        %s194 = scalar_select %p193, %s24, 0
        %s195 = smul.addr %s194, 4
        %s196 = scalar_lea.vmem %s1, %s195
        %p197 = pneg %p83
        %p198 = pneg %p80
        %p199 = scmp.lt.s32.totalorder %s24, 0
        %s200 = scalar_select %p199, %s24, 0
        %s201 = scalar_lea.vmem %s2, %s200
        %p202 = pneg %p109
        %p203 = pneg %p106
        %p204 = pneg %p139
        %p205 = pneg %p136
        %s206 = sand.u32 %s126, 1
        %s207 = scalar_lea.sflag [#allocation3], %s206
        %s208 = sand.u32 %s126, 1
        %s209 = smul.addr %s208, 256
        %s210 = scalar_lea.vmem [#allocation2], %s209
        %p211 = scmp.lt.s32.totalorder %s22, 1
        %s212 = scalar_select %p211, %s22, 1
        %s213 = smul.addr %s212, 54
        %s214 = smul.addr %s213, 4
        %s215 = scalar_lea.vmem %s0, %s214
        %p216 = scmp.lt.s32.totalorder %s24, 0
        %s217 = scalar_select %p216, %s24, 0
        %s218 = smul.addr %s217, 4
        %s219 = scalar_lea.vmem %s1, %s218
        %p220 = scmp.lt.s32.totalorder %s24, 0
        %s221 = scalar_select %p220, %s24, 0
        %s222 = scalar_lea.vmem %s2, %s221
        %s223 = smul.u32 16, %s23
        %s225 = smul.u32 %s23, 16
        %s226 = smul.u32 %s225, 3
        %s227 = smul.addr %s226, 4
        %s228 = scalar_lea.vmem %s215, %s227
        %v229 = vld [vmem:[%s228] sm:$0xf]
        %v230 = vld [vmem:[%s228 + $0x4] sm:$0xf]
        %v231 = vld [vmem:[%s228 + $0x8] sm:$0x1]
        %v232 = vld [vmem:[%s228 + $0xc] sm:$0xf]
        %v233 = vld [vmem:[%s228 + $0x10] sm:$0xf]
        %v234 = vld [vmem:[%s228 + $0x14] sm:$0x1]
        %v235 = vld [vmem:[%s228 + $0x18] sm:$0xf]
        %v236 = vld [vmem:[%s228 + $0x1c] sm:$0xf]
        %v237 = vld [vmem:[%s228 + $0x20] sm:$0x1]
        %v238 = vld [vmem:[%s228 + $0x24] sm:$0xf]
        %v239 = vld [vmem:[%s228 + $0x28] sm:$0xf]
        %v240 = vld [vmem:[%s228 + $0x2c] sm:$0x1]
        %v241 = vld [vmem:[%s228 + $0x30] sm:$0xf]
        %v242 = vld [vmem:[%s228 + $0x34] sm:$0xf]
        %v243 = vld [vmem:[%s228 + $0x38] sm:$0x1]
        %v244 = vld [vmem:[%s228 + $0x3c] sm:$0xf]
        %v245 = vld [vmem:[%s228 + $0x40] sm:$0xf]
        %v246 = vld [vmem:[%s228 + $0x44] sm:$0x1]
        %v247 = vld [vmem:[%s228 + $0x48] sm:$0xf]
        %v248 = vld [vmem:[%s228 + $0x4c] sm:$0xf]
        %v249 = vld [vmem:[%s228 + $0x50] sm:$0x1]
        %v250 = vld [vmem:[%s228 + $0x54] sm:$0xf]
        %v251 = vld [vmem:[%s228 + $0x58] sm:$0xf]
        %v252 = vld [vmem:[%s228 + $0x5c] sm:$0x1]
        %v253 = vld [vmem:[%s228 + $0x60] sm:$0xf]
        %v254 = vld [vmem:[%s228 + $0x64] sm:$0xf]
        %v255 = vld [vmem:[%s228 + $0x68] sm:$0x1]
        %v256 = vld [vmem:[%s228 + $0x6c] sm:$0xf]
        %v257 = vld [vmem:[%s228 + $0x70] sm:$0xf]
        %v258 = vld [vmem:[%s228 + $0x74] sm:$0x1]
        %v259 = vld [vmem:[%s228 + $0x78] sm:$0xf]
        %v260 = vld [vmem:[%s228 + $0x7c] sm:$0xf]
        %v261 = vld [vmem:[%s228 + $0x80] sm:$0x1]
        %v262 = vld [vmem:[%s228 + $0x84] sm:$0xf]
        %v263 = vld [vmem:[%s228 + $0x88] sm:$0xf]
        %v264 = vld [vmem:[%s228 + $0x8c] sm:$0x1]
        %v265 = vld [vmem:[%s228 + $0x90] sm:$0xf]
        %v266 = vld [vmem:[%s228 + $0x94] sm:$0xf]
        %v267 = vld [vmem:[%s228 + $0x98] sm:$0x1]
        %v268 = vld [vmem:[%s228 + $0x9c] sm:$0xf]
        %v269 = vld [vmem:[%s228 + $0xa0] sm:$0xf]
        %v270 = vld [vmem:[%s228 + $0xa4] sm:$0x1]
        %v271 = vld [vmem:[%s228 + $0xa8] sm:$0xf]
        %v272 = vld [vmem:[%s228 + $0xac] sm:$0xf]
        %v273 = vld [vmem:[%s228 + $0xb0] sm:$0x1]
        %v274 = vld [vmem:[%s228 + $0xb4] sm:$0xf]
        %v275 = vld [vmem:[%s228 + $0xb8] sm:$0xf]
        %v276 = vld [vmem:[%s228 + $0xbc] sm:$0x1]
        %v277 = vld [vmem:[%s228 + $0xc0] sm:$0xf]
        %v278 = vld [vmem:[%s228 + $0xc4] sm:$0xf]
        %v279 = vld [vmem:[%s228 + $0xc8] sm:$0x1]
        %v280 = vld [vmem:[%s228 + $0xcc] sm:$0xf]
        %v281 = vld [vmem:[%s228 + $0xd0] sm:$0xf]
        %v282 = vld [vmem:[%s228 + $0xd4] sm:$0x1]
        %vm283 = vsmask.f32 3328
        %vm284 = vsmask.f32 7440
        %vm285 = vmor %vm283, %vm284
        %v287 = vshrl.u32 %v229, 16
        %v289 = vrot.slane %v287, 4
        %v290 = vshll.u32 %v229, 16
        %v292 = vrot.slane %v290, 5
        %v293 = vor.u32 %v289, %v292
        %v294 = vrot.slane %v293, 4
        %v296 = vshll.u32 %v230, 16
        %v298 = vrot.slane %v296, 5
        %v299 = vsel %vm285, %v294, %v298
        %v300 = vshrl.u32 %v230, 16
        %v302 = vrot.slane %v300, 4
        %v303 = vor.u32 %v302, %v298
        %v304 = vrot.slane %v303, 4
        %v306 = vshll.u32 %v231, 16
        %v308 = vrot.slane %v306, 5
        %v309 = vsel %vm285, %v304, %v308
        %v311 = vshrl.u32 %v232, 16
        %v313 = vrot.slane %v311, 4
        %v314 = vshll.u32 %v232, 16
        %v316 = vrot.slane %v314, 5
        %v317 = vor.u32 %v313, %v316
        %v318 = vrot.slane %v317, 4
        %v320 = vshll.u32 %v233, 16
        %v322 = vrot.slane %v320, 5
        %v323 = vsel %vm285, %v318, %v322
        %v324 = vshrl.u32 %v233, 16
        %v326 = vrot.slane %v324, 4
        %v327 = vor.u32 %v326, %v322
        %v328 = vrot.slane %v327, 4
        %v330 = vshll.u32 %v234, 16
        %v332 = vrot.slane %v330, 5
        %v333 = vsel %vm285, %v328, %v332
        %v335 = vshrl.u32 %v235, 16
        %v337 = vrot.slane %v335, 4
        %v338 = vshll.u32 %v235, 16
        %v340 = vrot.slane %v338, 5
        %v341 = vor.u32 %v337, %v340
        %v342 = vrot.slane %v341, 4
        %v344 = vshll.u32 %v236, 16
        %v346 = vrot.slane %v344, 5
        %v347 = vsel %vm285, %v342, %v346
        %v348 = vshrl.u32 %v236, 16
        %v350 = vrot.slane %v348, 4
        %v351 = vor.u32 %v350, %v346
        %v352 = vrot.slane %v351, 4
        %v354 = vshll.u32 %v237, 16
        %v356 = vrot.slane %v354, 5
        %v357 = vsel %vm285, %v352, %v356
        %v359 = vshrl.u32 %v238, 16
        %v361 = vrot.slane %v359, 4
        %v362 = vshll.u32 %v238, 16
        %v364 = vrot.slane %v362, 5
        %v365 = vor.u32 %v361, %v364
        %v366 = vrot.slane %v365, 4
        %v368 = vshll.u32 %v239, 16
        %v370 = vrot.slane %v368, 5
        %v371 = vsel %vm285, %v366, %v370
        %v372 = vshrl.u32 %v239, 16
        %v374 = vrot.slane %v372, 4
        %v375 = vor.u32 %v374, %v370
        %v376 = vrot.slane %v375, 4
        %v378 = vshll.u32 %v240, 16
        %v380 = vrot.slane %v378, 5
        %v381 = vsel %vm285, %v376, %v380
        %v383 = vshrl.u32 %v241, 16
        %v385 = vrot.slane %v383, 4
        %v386 = vshll.u32 %v241, 16
        %v388 = vrot.slane %v386, 5
        %v389 = vor.u32 %v385, %v388
        %v390 = vrot.slane %v389, 4
        %v392 = vshll.u32 %v242, 16
        %v394 = vrot.slane %v392, 5
        %v395 = vsel %vm285, %v390, %v394
        %v396 = vshrl.u32 %v242, 16
        %v398 = vrot.slane %v396, 4
        %v399 = vor.u32 %v398, %v394
        %v400 = vrot.slane %v399, 4
        %v402 = vshll.u32 %v243, 16
        %v404 = vrot.slane %v402, 5
        %v405 = vsel %vm285, %v400, %v404
        %v407 = vshrl.u32 %v244, 16
        %v409 = vrot.slane %v407, 4
        %v410 = vshll.u32 %v244, 16
        %v412 = vrot.slane %v410, 5
        %v413 = vor.u32 %v409, %v412
        %v414 = vrot.slane %v413, 4
        %v416 = vshll.u32 %v245, 16
        %v418 = vrot.slane %v416, 5
        %v419 = vsel %vm285, %v414, %v418
        %v420 = vshrl.u32 %v245, 16
        %v422 = vrot.slane %v420, 4
        %v423 = vor.u32 %v422, %v418
        %v424 = vrot.slane %v423, 4
        %v426 = vshll.u32 %v246, 16
        %v428 = vrot.slane %v426, 5
        %v429 = vsel %vm285, %v424, %v428
        %v431 = vshrl.u32 %v247, 16
        %v433 = vrot.slane %v431, 4
        %v434 = vshll.u32 %v247, 16
        %v436 = vrot.slane %v434, 5
        %v437 = vor.u32 %v433, %v436
        %v438 = vrot.slane %v437, 4
        %v440 = vshll.u32 %v248, 16
        %v442 = vrot.slane %v440, 5
        %v443 = vsel %vm285, %v438, %v442
        %v444 = vshrl.u32 %v248, 16
        %v446 = vrot.slane %v444, 4
        %v447 = vor.u32 %v446, %v442
        %v448 = vrot.slane %v447, 4
        %v450 = vshll.u32 %v249, 16
        %v452 = vrot.slane %v450, 5
        %v453 = vsel %vm285, %v448, %v452
        %v455 = vshrl.u32 %v250, 16
        %v457 = vrot.slane %v455, 4
        %v458 = vshll.u32 %v250, 16
        %v460 = vrot.slane %v458, 5
        %v461 = vor.u32 %v457, %v460
        %v462 = vrot.slane %v461, 4
        %v464 = vshll.u32 %v251, 16
        %v466 = vrot.slane %v464, 5
        %v467 = vsel %vm285, %v462, %v466
        %v468 = vshrl.u32 %v251, 16
        %v470 = vrot.slane %v468, 4
        %v471 = vor.u32 %v470, %v466
        %v472 = vrot.slane %v471, 4
        %v474 = vshll.u32 %v252, 16
        %v476 = vrot.slane %v474, 5
        %v477 = vsel %vm285, %v472, %v476
        %v479 = vshrl.u32 %v253, 16
        %v481 = vrot.slane %v479, 4
        %v482 = vshll.u32 %v253, 16
        %v484 = vrot.slane %v482, 5
        %v485 = vor.u32 %v481, %v484
        %v486 = vrot.slane %v485, 4
        %v488 = vshll.u32 %v254, 16
        %v490 = vrot.slane %v488, 5
        %v491 = vsel %vm285, %v486, %v490
        %v492 = vshrl.u32 %v254, 16
        %v494 = vrot.slane %v492, 4
        %v495 = vor.u32 %v494, %v490
        %v496 = vrot.slane %v495, 4
        %v498 = vshll.u32 %v255, 16
        %v500 = vrot.slane %v498, 5
        %v501 = vsel %vm285, %v496, %v500
        %v503 = vshrl.u32 %v256, 16
        %v505 = vrot.slane %v503, 4
        %v506 = vshll.u32 %v256, 16
        %v508 = vrot.slane %v506, 5
        %v509 = vor.u32 %v505, %v508
        %v510 = vrot.slane %v509, 4
        %v512 = vshll.u32 %v257, 16
        %v514 = vrot.slane %v512, 5
        %v515 = vsel %vm285, %v510, %v514
        %v516 = vshrl.u32 %v257, 16
        %v518 = vrot.slane %v516, 4
        %v519 = vor.u32 %v518, %v514
        %v520 = vrot.slane %v519, 4
        %v522 = vshll.u32 %v258, 16
        %v524 = vrot.slane %v522, 5
        %v525 = vsel %vm285, %v520, %v524
        %v527 = vshrl.u32 %v259, 16
        %v529 = vrot.slane %v527, 4
        %v530 = vshll.u32 %v259, 16
        %v532 = vrot.slane %v530, 5
        %v533 = vor.u32 %v529, %v532
        %v534 = vrot.slane %v533, 4
        %v536 = vshll.u32 %v260, 16
        %v538 = vrot.slane %v536, 5
        %v539 = vsel %vm285, %v534, %v538
        %v540 = vshrl.u32 %v260, 16
        %v542 = vrot.slane %v540, 4
        %v543 = vor.u32 %v542, %v538
        %v544 = vrot.slane %v543, 4
        %v546 = vshll.u32 %v261, 16
        %v548 = vrot.slane %v546, 5
        %v549 = vsel %vm285, %v544, %v548
        %v551 = vshrl.u32 %v262, 16
        %v553 = vrot.slane %v551, 4
        %v554 = vshll.u32 %v262, 16
        %v556 = vrot.slane %v554, 5
        %v557 = vor.u32 %v553, %v556
        %v558 = vrot.slane %v557, 4
        %v560 = vshll.u32 %v263, 16
        %v562 = vrot.slane %v560, 5
        %v563 = vsel %vm285, %v558, %v562
        %v564 = vshrl.u32 %v263, 16
        %v566 = vrot.slane %v564, 4
        %v567 = vor.u32 %v566, %v562
        %v568 = vrot.slane %v567, 4
        %v570 = vshll.u32 %v264, 16
        %v572 = vrot.slane %v570, 5
        %v573 = vsel %vm285, %v568, %v572
        %v575 = vshrl.u32 %v265, 16
        %v577 = vrot.slane %v575, 4
        %v578 = vshll.u32 %v265, 16
        %v580 = vrot.slane %v578, 5
        %v581 = vor.u32 %v577, %v580
        %v582 = vrot.slane %v581, 4
        %v584 = vshll.u32 %v266, 16
        %v586 = vrot.slane %v584, 5
        %v587 = vsel %vm285, %v582, %v586
        %v588 = vshrl.u32 %v266, 16
        %v590 = vrot.slane %v588, 4
        %v591 = vor.u32 %v590, %v586
        %v592 = vrot.slane %v591, 4
        %v594 = vshll.u32 %v267, 16
        %v596 = vrot.slane %v594, 5
        %v597 = vsel %vm285, %v592, %v596
        %v599 = vshrl.u32 %v268, 16
        %v601 = vrot.slane %v599, 4
        %v602 = vshll.u32 %v268, 16
        %v604 = vrot.slane %v602, 5
        %v605 = vor.u32 %v601, %v604
        %v606 = vrot.slane %v605, 4
        %v608 = vshll.u32 %v269, 16
        %v610 = vrot.slane %v608, 5
        %v611 = vsel %vm285, %v606, %v610
        %v612 = vshrl.u32 %v269, 16
        %v614 = vrot.slane %v612, 4
        %v615 = vor.u32 %v614, %v610
        %v616 = vrot.slane %v615, 4
        %v618 = vshll.u32 %v270, 16
        %v620 = vrot.slane %v618, 5
        %v621 = vsel %vm285, %v616, %v620
        %v623 = vshrl.u32 %v271, 16
        %v625 = vrot.slane %v623, 4
        %v626 = vshll.u32 %v271, 16
        %v628 = vrot.slane %v626, 5
        %v629 = vor.u32 %v625, %v628
        %v630 = vrot.slane %v629, 4
        %v632 = vshll.u32 %v272, 16
        %v634 = vrot.slane %v632, 5
        %v635 = vsel %vm285, %v630, %v634
        %v636 = vshrl.u32 %v272, 16
        %v638 = vrot.slane %v636, 4
        %v639 = vor.u32 %v638, %v634
        %v640 = vrot.slane %v639, 4
        %v642 = vshll.u32 %v273, 16
        %v644 = vrot.slane %v642, 5
        %v645 = vsel %vm285, %v640, %v644
        %v647 = vshrl.u32 %v274, 16
        %v649 = vrot.slane %v647, 4
        %v650 = vshll.u32 %v274, 16
        %v652 = vrot.slane %v650, 5
        %v653 = vor.u32 %v649, %v652
        %v654 = vrot.slane %v653, 4
        %v656 = vshll.u32 %v275, 16
        %v658 = vrot.slane %v656, 5
        %v659 = vsel %vm285, %v654, %v658
        %v660 = vshrl.u32 %v275, 16
        %v662 = vrot.slane %v660, 4
        %v663 = vor.u32 %v662, %v658
        %v664 = vrot.slane %v663, 4
        %v666 = vshll.u32 %v276, 16
        %v668 = vrot.slane %v666, 5
        %v669 = vsel %vm285, %v664, %v668
        %vm718 = vcmask 1042432
        %vm719 = vcmask 1046532
        %vm720 = vmor %vm718, %vm719
        %v721 = vrot.slane %v229, 5
        %v722 = vrot.slane %v721, 4
        %v723 = vrot.slane %v230, 5
        %v724 = vsel %vm720, %v722, %v723
        %v725 = vrot.slane %v723, 4
        %v726 = vrot.slane %v231, 5
        %v727 = vsel %vm720, %v725, %v726
        %v728 = vrot.slane %v232, 5
        %v729 = vrot.slane %v728, 4
        %v730 = vrot.slane %v233, 5
        %v731 = vsel %vm720, %v729, %v730
        %v732 = vrot.slane %v730, 4
        %v733 = vrot.slane %v234, 5
        %v734 = vsel %vm720, %v732, %v733
        %v735 = vrot.slane %v235, 5
        %v736 = vrot.slane %v735, 4
        %v737 = vrot.slane %v236, 5
        %v738 = vsel %vm720, %v736, %v737
        %v739 = vrot.slane %v737, 4
        %v740 = vrot.slane %v237, 5
        %v741 = vsel %vm720, %v739, %v740
        %v742 = vrot.slane %v238, 5
        %v743 = vrot.slane %v742, 4
        %v744 = vrot.slane %v239, 5
        %v745 = vsel %vm720, %v743, %v744
        %v746 = vrot.slane %v744, 4
        %v747 = vrot.slane %v240, 5
        %v748 = vsel %vm720, %v746, %v747
        %v749 = vrot.slane %v241, 5
        %v750 = vrot.slane %v749, 4
        %v751 = vrot.slane %v242, 5
        %v752 = vsel %vm720, %v750, %v751
        %v753 = vrot.slane %v751, 4
        %v754 = vrot.slane %v243, 5
        %v755 = vsel %vm720, %v753, %v754
        %v756 = vrot.slane %v244, 5
        %v757 = vrot.slane %v756, 4
        %v758 = vrot.slane %v245, 5
        %v759 = vsel %vm720, %v757, %v758
        %v760 = vrot.slane %v758, 4
        %v761 = vrot.slane %v246, 5
        %v762 = vsel %vm720, %v760, %v761
        %v763 = vrot.slane %v247, 5
        %v764 = vrot.slane %v763, 4
        %v765 = vrot.slane %v248, 5
        %v766 = vsel %vm720, %v764, %v765
        %v767 = vrot.slane %v765, 4
        %v768 = vrot.slane %v249, 5
        %v769 = vsel %vm720, %v767, %v768
        %v770 = vrot.slane %v250, 5
        %v771 = vrot.slane %v770, 4
        %v772 = vrot.slane %v251, 5
        %v773 = vsel %vm720, %v771, %v772
        %v774 = vrot.slane %v772, 4
        %v775 = vrot.slane %v252, 5
        %v776 = vsel %vm720, %v774, %v775
        %v777 = vrot.slane %v253, 5
        %v778 = vrot.slane %v777, 4
        %v779 = vrot.slane %v254, 5
        %v780 = vsel %vm720, %v778, %v779
        %v781 = vrot.slane %v779, 4
        %v782 = vrot.slane %v255, 5
        %v783 = vsel %vm720, %v781, %v782
        %v784 = vrot.slane %v256, 5
        %v785 = vrot.slane %v784, 4
        %v786 = vrot.slane %v257, 5
        %v787 = vsel %vm720, %v785, %v786
        %v788 = vrot.slane %v786, 4
        %v789 = vrot.slane %v258, 5
        %v790 = vsel %vm720, %v788, %v789
        %v791 = vrot.slane %v259, 5
        %v792 = vrot.slane %v791, 4
        %v793 = vrot.slane %v260, 5
        %v794 = vsel %vm720, %v792, %v793
        %v795 = vrot.slane %v793, 4
        %v796 = vrot.slane %v261, 5
        %v797 = vsel %vm720, %v795, %v796
        %v798 = vrot.slane %v262, 5
        %v799 = vrot.slane %v798, 4
        %v800 = vrot.slane %v263, 5
        %v801 = vsel %vm720, %v799, %v800
        %v802 = vrot.slane %v800, 4
        %v803 = vrot.slane %v264, 5
        %v804 = vsel %vm720, %v802, %v803
        %v805 = vrot.slane %v265, 5
        %v806 = vrot.slane %v805, 4
        %v807 = vrot.slane %v266, 5
        %v808 = vsel %vm720, %v806, %v807
        %v809 = vrot.slane %v807, 4
        %v810 = vrot.slane %v267, 5
        %v811 = vsel %vm720, %v809, %v810
        %v812 = vrot.slane %v268, 5
        %v813 = vrot.slane %v812, 4
        %v814 = vrot.slane %v269, 5
        %v815 = vsel %vm720, %v813, %v814
        %v816 = vrot.slane %v814, 4
        %v817 = vrot.slane %v270, 5
        %v818 = vsel %vm720, %v816, %v817
        %v819 = vrot.slane %v271, 5
        %v820 = vrot.slane %v819, 4
        %v821 = vrot.slane %v272, 5
        %v822 = vsel %vm720, %v820, %v821
        %v823 = vrot.slane %v821, 4
        %v824 = vrot.slane %v273, 5
        %v825 = vsel %vm720, %v823, %v824
        %v826 = vrot.slane %v274, 5
        %v827 = vrot.slane %v826, 4
        %v828 = vrot.slane %v275, 5
        %v829 = vsel %vm720, %v827, %v828
        %v830 = vrot.slane %v828, 4
        %v831 = vrot.slane %v276, 5
        %v832 = vsel %vm720, %v830, %v831
        %v833 = vunpack.c.l.b16 %v229
        %v834 = vunpack.c.l.b16 %v230
        %v835 = vunpack.c.l.b16 %v232
        %v836 = vunpack.c.l.b16 %v233
        %v837 = vunpack.c.l.b16 %v235
        %v838 = vunpack.c.l.b16 %v236
        %v839 = vunpack.c.l.b16 %v238
        %v840 = vunpack.c.l.b16 %v239
        %v841 = vunpack.c.l.b16 %v241
        %v842 = vunpack.c.l.b16 %v242
        %v843 = vunpack.c.l.b16 %v244
        %v844 = vunpack.c.l.b16 %v245
        %v845 = vunpack.c.l.b16 %v247
        %v846 = vunpack.c.l.b16 %v248
        %v847 = vunpack.c.l.b16 %v250
        %v848 = vunpack.c.l.b16 %v251
        %v849 = vunpack.c.l.b16 %v253
        %v850 = vunpack.c.l.b16 %v254
        %v851 = vunpack.c.l.b16 %v256
        %v852 = vunpack.c.l.b16 %v257
        %v853 = vunpack.c.l.b16 %v259
        %v854 = vunpack.c.l.b16 %v260
        %v855 = vunpack.c.l.b16 %v262
        %v856 = vunpack.c.l.b16 %v263
        %v857 = vunpack.c.l.b16 %v265
        %v858 = vunpack.c.l.b16 %v266
        %v859 = vunpack.c.l.b16 %v268
        %v860 = vunpack.c.l.b16 %v269
        %v861 = vunpack.c.l.b16 %v271
        %v862 = vunpack.c.l.b16 %v272
        %v863 = vunpack.c.l.b16 %v274
        %v864 = vunpack.c.l.b16 %v275
        %v865 = vpack.c.b16 %v834, %v833
        %v866 = vpack.c.b16 %v836, %v835
        %v867 = vpack.c.b16 %v838, %v837
        %v868 = vpack.c.b16 %v840, %v839
        %v869 = vpack.c.b16 %v842, %v841
        %v870 = vpack.c.b16 %v844, %v843
        %v871 = vpack.c.b16 %v846, %v845
        %v872 = vpack.c.b16 %v848, %v847
        %v873 = vpack.c.b16 %v850, %v849
        %v874 = vpack.c.b16 %v852, %v851
        %v875 = vpack.c.b16 %v854, %v853
        %v876 = vpack.c.b16 %v856, %v855
        %v877 = vpack.c.b16 %v858, %v857
        %v878 = vpack.c.b16 %v860, %v859
        %v879 = vpack.c.b16 %v862, %v861
        %v880 = vpack.c.b16 %v864, %v863
        %v881 = vunpack.c.l.b16 %v299
        %v882 = vunpack.c.l.b16 %v309
        %v883 = vunpack.c.l.b16 %v323
        %v884 = vunpack.c.l.b16 %v333
        %v885 = vunpack.c.l.b16 %v347
        %v886 = vunpack.c.l.b16 %v357
        %v887 = vunpack.c.l.b16 %v371
        %v888 = vunpack.c.l.b16 %v381
        %v889 = vunpack.c.l.b16 %v395
        %v890 = vunpack.c.l.b16 %v405
        %v891 = vunpack.c.l.b16 %v419
        %v892 = vunpack.c.l.b16 %v429
        %v893 = vunpack.c.l.b16 %v443
        %v894 = vunpack.c.l.b16 %v453
        %v895 = vunpack.c.l.b16 %v467
        %v896 = vunpack.c.l.b16 %v477
        %v897 = vunpack.c.l.b16 %v491
        %v898 = vunpack.c.l.b16 %v501
        %v899 = vunpack.c.l.b16 %v515
        %v900 = vunpack.c.l.b16 %v525
        %v901 = vunpack.c.l.b16 %v539
        %v902 = vunpack.c.l.b16 %v549
        %v903 = vunpack.c.l.b16 %v563
        %v904 = vunpack.c.l.b16 %v573
        %v905 = vunpack.c.l.b16 %v587
        %v906 = vunpack.c.l.b16 %v597
        %v907 = vunpack.c.l.b16 %v611
        %v908 = vunpack.c.l.b16 %v621
        %v909 = vunpack.c.l.b16 %v635
        %v910 = vunpack.c.l.b16 %v645
        %v911 = vunpack.c.l.b16 %v659
        %v912 = vunpack.c.l.b16 %v669
        %v913 = vpack.c.b16 %v882, %v881
        %v914 = vpack.c.b16 %v884, %v883
        %v915 = vpack.c.b16 %v886, %v885
        %v916 = vpack.c.b16 %v888, %v887
        %v917 = vpack.c.b16 %v890, %v889
        %v918 = vpack.c.b16 %v892, %v891
        %v919 = vpack.c.b16 %v894, %v893
        %v920 = vpack.c.b16 %v896, %v895
        %v921 = vpack.c.b16 %v898, %v897
        %v922 = vpack.c.b16 %v900, %v899
        %v923 = vpack.c.b16 %v902, %v901
        %v924 = vpack.c.b16 %v904, %v903
        %v925 = vpack.c.b16 %v906, %v905
        %v926 = vpack.c.b16 %v908, %v907
        %v927 = vpack.c.b16 %v910, %v909
        %v928 = vpack.c.b16 %v912, %v911
        %929 = vrot.lane.b32.xlu0 %v913, 4
        %v930 = vpop.permute.xlu0 %929
        %931 = vrot.lane.b32.xlu0 %v914, 4
        %v932 = vpop.permute.xlu0 %931
        %933 = vrot.lane.b32.xlu0 %v915, 4
        %v934 = vpop.permute.xlu0 %933
        %935 = vrot.lane.b32.xlu0 %v916, 4
        %v936 = vpop.permute.xlu0 %935
        %937 = vrot.lane.b32.xlu0 %v917, 4
        %v938 = vpop.permute.xlu0 %937
        %939 = vrot.lane.b32.xlu0 %v918, 4
        %v940 = vpop.permute.xlu0 %939
        %941 = vrot.lane.b32.xlu0 %v919, 4
        %v942 = vpop.permute.xlu0 %941
        %943 = vrot.lane.b32.xlu0 %v920, 4
        %v944 = vpop.permute.xlu0 %943
        %945 = vrot.lane.b32.xlu0 %v921, 4
        %v946 = vpop.permute.xlu0 %945
        %947 = vrot.lane.b32.xlu0 %v922, 4
        %v948 = vpop.permute.xlu0 %947
        %949 = vrot.lane.b32.xlu0 %v923, 4
        %v950 = vpop.permute.xlu0 %949
        %951 = vrot.lane.b32.xlu0 %v924, 4
        %v952 = vpop.permute.xlu0 %951
        %953 = vrot.lane.b32.xlu0 %v925, 4
        %v954 = vpop.permute.xlu0 %953
        %955 = vrot.lane.b32.xlu0 %v926, 4
        %v956 = vpop.permute.xlu0 %955
        %957 = vrot.lane.b32.xlu0 %v927, 4
        %v958 = vpop.permute.xlu0 %957
        %959 = vrot.lane.b32.xlu0 %v928, 4
        %v960 = vpop.permute.xlu0 %959
        %v961 = vunpack.c.l.b16 %v724
        %v962 = vunpack.c.l.b16 %v727
        %v963 = vunpack.c.l.b16 %v731
        %v964 = vunpack.c.l.b16 %v734
        %v965 = vunpack.c.l.b16 %v738
        %v966 = vunpack.c.l.b16 %v741
        %v967 = vunpack.c.l.b16 %v745
        %v968 = vunpack.c.l.b16 %v748
        %v969 = vunpack.c.l.b16 %v752
        %v970 = vunpack.c.l.b16 %v755
        %v971 = vunpack.c.l.b16 %v759
        %v972 = vunpack.c.l.b16 %v762
        %v973 = vunpack.c.l.b16 %v766
        %v974 = vunpack.c.l.b16 %v769
        %v975 = vunpack.c.l.b16 %v773
        %v976 = vunpack.c.l.b16 %v776
        %v977 = vunpack.c.l.b16 %v780
        %v978 = vunpack.c.l.b16 %v783
        %v979 = vunpack.c.l.b16 %v787
        %v980 = vunpack.c.l.b16 %v790
        %v981 = vunpack.c.l.b16 %v794
        %v982 = vunpack.c.l.b16 %v797
        %v983 = vunpack.c.l.b16 %v801
        %v984 = vunpack.c.l.b16 %v804
        %v985 = vunpack.c.l.b16 %v808
        %v986 = vunpack.c.l.b16 %v811
        %v987 = vunpack.c.l.b16 %v815
        %v988 = vunpack.c.l.b16 %v818
        %v989 = vunpack.c.l.b16 %v822
        %v990 = vunpack.c.l.b16 %v825
        %v991 = vunpack.c.l.b16 %v829
        %v992 = vunpack.c.l.b16 %v832
        %v993 = vpack.c.b16 %v962, %v961
        %v994 = vpack.c.b16 %v964, %v963
        %v995 = vpack.c.b16 %v966, %v965
        %v996 = vpack.c.b16 %v968, %v967
        %v997 = vpack.c.b16 %v970, %v969
        %v998 = vpack.c.b16 %v972, %v971
        %v999 = vpack.c.b16 %v974, %v973
        %v1000 = vpack.c.b16 %v976, %v975
        %v1001 = vpack.c.b16 %v978, %v977
        %v1002 = vpack.c.b16 %v980, %v979
        %v1003 = vpack.c.b16 %v982, %v981
        %v1004 = vpack.c.b16 %v984, %v983
        %v1005 = vpack.c.b16 %v986, %v985
        %v1006 = vpack.c.b16 %v988, %v987
        %v1007 = vpack.c.b16 %v990, %v989
        %v1008 = vpack.c.b16 %v992, %v991
        %1009 = vrot.lane.b32.xlu0 %v993, 8
        %v1010 = vpop.permute.xlu0 %1009
        %1011 = vrot.lane.b32.xlu0 %v994, 8
        %v1012 = vpop.permute.xlu0 %1011
        %1013 = vrot.lane.b32.xlu0 %v995, 8
        %v1014 = vpop.permute.xlu0 %1013
        %1015 = vrot.lane.b32.xlu0 %v996, 8
        %v1016 = vpop.permute.xlu0 %1015
        %1017 = vrot.lane.b32.xlu0 %v997, 8
        %v1018 = vpop.permute.xlu0 %1017
        %1019 = vrot.lane.b32.xlu0 %v998, 8
        %v1020 = vpop.permute.xlu0 %1019
        %1021 = vrot.lane.b32.xlu0 %v999, 8
        %v1022 = vpop.permute.xlu0 %1021
        %1023 = vrot.lane.b32.xlu0 %v1000, 8
        %v1024 = vpop.permute.xlu0 %1023
        %1025 = vrot.lane.b32.xlu0 %v1001, 8
        %v1026 = vpop.permute.xlu0 %1025
        %1027 = vrot.lane.b32.xlu0 %v1002, 8
        %v1028 = vpop.permute.xlu0 %1027
        %1029 = vrot.lane.b32.xlu0 %v1003, 8
        %v1030 = vpop.permute.xlu0 %1029
        %1031 = vrot.lane.b32.xlu0 %v1004, 8
        %v1032 = vpop.permute.xlu0 %1031
        %1033 = vrot.lane.b32.xlu0 %v1005, 8
        %v1034 = vpop.permute.xlu0 %1033
        %1035 = vrot.lane.b32.xlu0 %v1006, 8
        %v1036 = vpop.permute.xlu0 %1035
        %1037 = vrot.lane.b32.xlu0 %v1007, 8
        %v1038 = vpop.permute.xlu0 %1037
        %1039 = vrot.lane.b32.xlu0 %v1008, 8
        %v1040 = vpop.permute.xlu0 %1039
        %vm1041 = vcmask 31744
        %v1044 = vsel %vm1041, %v865, %v930
        %v1047 = vsel %vm1041, %v866, %v932
        %v1050 = vsel %vm1041, %v867, %v934
        %v1053 = vsel %vm1041, %v868, %v936
        %v1056 = vsel %vm1041, %v869, %v938
        %v1059 = vsel %vm1041, %v870, %v940
        %v1062 = vsel %vm1041, %v871, %v942
        %v1065 = vsel %vm1041, %v872, %v944
        %v1068 = vsel %vm1041, %v873, %v946
        %v1071 = vsel %vm1041, %v874, %v948
        %v1074 = vsel %vm1041, %v875, %v950
        %v1077 = vsel %vm1041, %v876, %v952
        %v1080 = vsel %vm1041, %v877, %v954
        %v1083 = vsel %vm1041, %v878, %v956
        %v1086 = vsel %vm1041, %v879, %v958
        %v1089 = vsel %vm1041, %v880, %v960
        %vm1090 = vcmask 64512
        %v1092 = vsel %vm1090, %v1044, %v1010
        %v1094 = vsel %vm1090, %v1047, %v1012
        %v1096 = vsel %vm1090, %v1050, %v1014
        %v1098 = vsel %vm1090, %v1053, %v1016
        %v1100 = vsel %vm1090, %v1056, %v1018
        %v1102 = vsel %vm1090, %v1059, %v1020
        %v1104 = vsel %vm1090, %v1062, %v1022
        %v1106 = vsel %vm1090, %v1065, %v1024
        %v1108 = vsel %vm1090, %v1068, %v1026
        %v1110 = vsel %vm1090, %v1071, %v1028
        %v1112 = vsel %vm1090, %v1074, %v1030
        %v1114 = vsel %vm1090, %v1077, %v1032
        %v1116 = vsel %vm1090, %v1080, %v1034
        %v1118 = vsel %vm1090, %v1083, %v1036
        %v1120 = vsel %vm1090, %v1086, %v1038
        %v1122 = vsel %vm1090, %v1089, %v1040
        %v1123 = vld [vmem:[%s219] sm:$0xf]
        %v1124 = vld [vmem:[%s219 + $0x4] sm:$0x3]
        %v1126 = vshrl.u32 %v277, 16
        %v1128 = vrot.slane %v1126, 4
        %v1129 = vshll.u32 %v277, 16
        %v1131 = vrot.slane %v1129, 5
        %v1132 = vor.u32 %v1128, %v1131
        %v1133 = vrot.slane %v1132, 4
        %v1135 = vshll.u32 %v278, 16
        %v1137 = vrot.slane %v1135, 5
        %v1138 = vsel %vm285, %v1133, %v1137
        %v1139 = vshrl.u32 %v278, 16
        %v1141 = vrot.slane %v1139, 4
        %v1142 = vor.u32 %v1141, %v1137
        %v1143 = vrot.slane %v1142, 4
        %v1145 = vshll.u32 %v279, 16
        %v1147 = vrot.slane %v1145, 5
        %v1148 = vsel %vm285, %v1143, %v1147
        %v1152 = vrot.slane %v277, 5
        %v1153 = vrot.slane %v1152, 4
        %v1154 = vrot.slane %v278, 5
        %v1155 = vsel %vm720, %v1153, %v1154
        %v1156 = vrot.slane %v1154, 4
        %v1157 = vrot.slane %v279, 5
        %v1158 = vsel %vm720, %v1156, %v1157
        %v1159 = vunpack.c.l.b16 %v277
        %v1160 = vunpack.c.l.b16 %v278
        %v1161 = vpack.c.b16 %v1160, %v1159
        %v1162 = vunpack.c.l.b16 %v1138
        %v1163 = vunpack.c.l.b16 %v1148
        %v1164 = vpack.c.b16 %v1163, %v1162
        %1165 = vrot.lane.b32.xlu0 %v1164, 4
        %v1166 = vpop.permute.xlu0 %1165
        %v1167 = vunpack.c.l.b16 %v1155
        %v1168 = vunpack.c.l.b16 %v1158
        %v1169 = vpack.c.b16 %v1168, %v1167
        %1170 = vrot.lane.b32.xlu0 %v1169, 8
        %v1171 = vpop.permute.xlu0 %1170
        %v1174 = vsel %vm1041, %v1161, %v1166
        %v1176 = vsel %vm1090, %v1174, %v1171
        %s1177 = scalar_lea.vmem %s219, 8
        %v1178 = vld [vmem:[%s1177] sm:$0xf]
        %v1179 = vld [vmem:[%s1177 + $0x4] sm:$0x3]
        %v1182 = vunpack.c.l.b16 %v1178
        %v1183 = vunpack.c.l.b16 %v1179
        %v1184 = vpack.c.b16 %v1183, %v1182
        %vm1185 = vcmask 97280
        %v1186 = vsel %vm1185, %v1094, 0
        %v1188 = vsel %vm1185, %v1096, 0
        %v1190 = vsel %vm1185, %v1098, 0
        %v1192 = vsel %vm1185, %v1100, 0
        %v1194 = vsel %vm1185, %v1102, 0
        %v1196 = vsel %vm1185, %v1104, 0
        %v1198 = vsel %vm1185, %v1106, 0
        %v1200 = vsel %vm1185, %v1108, 0
        %v1202 = vsel %vm1185, %v1110, 0
        %v1204 = vsel %vm1185, %v1112, 0
        %v1206 = vsel %vm1185, %v1114, 0
        %v1208 = vsel %vm1185, %v1116, 0
        %v1210 = vsel %vm1185, %v1118, 0
        %v1212 = vsel %vm1185, %v1120, 0
        %v1214 = vsel %vm1185, %v1122, 0
        %v1216 = vsel %vm1185, %v1176, 0
        %vm1218 = vcmask 1045504
        %v1220 = vsel %vm1218, %v1184, 0
        %1222 = vmatprep.subr.bf16.mxu0 0
        %1223 = vmatpush1.bf16.msra.mxu0 0
        %1224 = vmatprep.subr.bf16.mxu0 0
        %1225 = vmatpush1.bf16.msra.mxu0 0
        %1226 = vmatprep.subr.bf16.mxu0 0
        %1227 = vmatpush1.bf16.msra.mxu0 0
        %1228 = vmatprep.subr.bf16.mxu0 0
        %1229 = vmatpush1.bf16.msra.mxu0 0
        %1230 = vmatprep.subr.bf16.mxu0 0
        %1231 = vmatpush1.bf16.msra.mxu0 0
        %1232 = vmatprep.subr.bf16.mxu0 0
        %1233 = vmatpush1.bf16.msra.mxu0 0
        %1234 = vmatprep.subr.bf16.mxu0 0
        %1235 = vmatpush1.bf16.msra.mxu0 0
        %1236 = vmatprep.subr.bf16.mxu0 0
        %1237 = vmatpush1.bf16.msra.mxu0 %v1220
        %1238 = vmatprep.subr.bf16.mxu0 0
        %1239 = vmatpush2.bf16.msra.mxu0 0
        %1240 = vmatprep.subr.bf16.mxu0 0
        %1241 = vmatpush2.bf16.msra.mxu0 0
        %1242 = vmatprep.subr.bf16.mxu0 0
        %1243 = vmatpush2.bf16.msra.mxu0 0
        %1244 = vmatprep.subr.bf16.mxu0 0
        %1245 = vmatpush2.bf16.msra.mxu0 0
        %1246 = vmatprep.subr.bf16.mxu0 0
        %1247 = vmatpush2.bf16.msra.mxu0 0
        %1248 = vmatprep.subr.bf16.mxu0 0
        %1249 = vmatpush2.bf16.msra.mxu0 0
        %1250 = vmatprep.subr.bf16.mxu0 0
        %1251 = vmatpush2.bf16.msra.mxu0 0
        %1252 = vmatprep.subr.bf16.mxu0 0
        %1253 = vmatpush2.bf16.msra.mxu0 0
        %1254 = vmatprep.mubr.bf16.mxu0 0
        %1255 = vmatmul.mubr.bf16.gmra.mxu0 %v1186
        %v1256 = vpop.f32.mrf.mxu0
        %v1257 = vadd.f32 0.0, %v1256
        %v1258 = vpop.f32.mrf.mxu0
        %v1259 = vpop.f32.mrf.mxu0
        %v1260 = vadd.f32 0.0, %v1259
        %v1261 = vpop.f32.mrf.mxu0
        %1262 = vmatprep.mubr.bf16.mxu0 0
        %1263 = vmatmul.mubr.bf16.gmra.mxu0 %v1188
        %v1264 = vpop.f32.mrf.mxu0
        %v1265 = vadd.f32 0.0, %v1264
        %v1266 = vpop.f32.mrf.mxu0
        %v1267 = vpop.f32.mrf.mxu0
        %v1268 = vadd.f32 0.0, %v1267
        %v1269 = vpop.f32.mrf.mxu0
        %1270 = vmatprep.mubr.bf16.mxu0 0
        %1271 = vmatmul.mubr.bf16.gmra.mxu0 %v1190
        %v1272 = vpop.f32.mrf.mxu0
        %v1273 = vadd.f32 0.0, %v1272
        %v1274 = vpop.f32.mrf.mxu0
        %v1275 = vpop.f32.mrf.mxu0
        %v1276 = vadd.f32 0.0, %v1275
        %v1277 = vpop.f32.mrf.mxu0
        %1278 = vmatprep.mubr.bf16.mxu0 0
        %1279 = vmatmul.mubr.bf16.gmra.mxu0 %v1192
        %v1280 = vpop.f32.mrf.mxu0
        %v1281 = vadd.f32 0.0, %v1280
        %v1282 = vpop.f32.mrf.mxu0
        %v1283 = vpop.f32.mrf.mxu0
        %v1284 = vadd.f32 0.0, %v1283
        %v1285 = vpop.f32.mrf.mxu0
        %1286 = vmatprep.mubr.bf16.mxu0 0
        %1287 = vmatmul.mubr.bf16.gmra.mxu0 %v1194
        %v1288 = vpop.f32.mrf.mxu0
        %v1289 = vadd.f32 0.0, %v1288
        %v1290 = vpop.f32.mrf.mxu0
        %v1291 = vpop.f32.mrf.mxu0
        %v1292 = vadd.f32 0.0, %v1291
        %v1293 = vpop.f32.mrf.mxu0
        %1294 = vmatprep.mubr.bf16.mxu0 0
        %1295 = vmatmul.mubr.bf16.gmra.mxu0 %v1196
        %v1296 = vpop.f32.mrf.mxu0
        %v1297 = vadd.f32 0.0, %v1296
        %v1298 = vpop.f32.mrf.mxu0
        %v1299 = vpop.f32.mrf.mxu0
        %v1300 = vadd.f32 0.0, %v1299
        %v1301 = vpop.f32.mrf.mxu0
        %1302 = vmatprep.mubr.bf16.mxu0 0
        %1303 = vmatmul.mubr.bf16.gmra.mxu0 %v1198
        %v1304 = vpop.f32.mrf.mxu0
        %v1305 = vadd.f32 0.0, %v1304
        %v1306 = vpop.f32.mrf.mxu0
        %v1307 = vpop.f32.mrf.mxu0
        %v1308 = vadd.f32 0.0, %v1307
        %v1309 = vpop.f32.mrf.mxu0
        %1310 = vmatprep.mubr.bf16.mxu0 0
        %1311 = vmatmul.mubr.bf16.gmra.mxu0 %v1200
        %v1312 = vpop.f32.mrf.mxu0
        %v1313 = vadd.f32 0.0, %v1312
        %v1314 = vpop.f32.mrf.mxu0
        %v1315 = vpop.f32.mrf.mxu0
        %v1316 = vadd.f32 0.0, %v1315
        %v1317 = vpop.f32.mrf.mxu0
        %1318 = vmatprep.mubr.bf16.mxu0 0
        %1319 = vmatmul.mubr.bf16.gmra.mxu0 %v1202
        %v1320 = vpop.f32.mrf.mxu0
        %v1321 = vadd.f32 0.0, %v1320
        %v1322 = vpop.f32.mrf.mxu0
        %v1323 = vpop.f32.mrf.mxu0
        %v1324 = vadd.f32 0.0, %v1323
        %v1325 = vpop.f32.mrf.mxu0
        %1326 = vmatprep.mubr.bf16.mxu0 0
        %1327 = vmatmul.mubr.bf16.gmra.mxu0 %v1204
        %v1328 = vpop.f32.mrf.mxu0
        %v1329 = vadd.f32 0.0, %v1328
        %v1330 = vpop.f32.mrf.mxu0
        %v1331 = vpop.f32.mrf.mxu0
        %v1332 = vadd.f32 0.0, %v1331
        %v1333 = vpop.f32.mrf.mxu0
        %1334 = vmatprep.mubr.bf16.mxu0 0
        %1335 = vmatmul.mubr.bf16.gmra.mxu0 %v1206
        %v1336 = vpop.f32.mrf.mxu0
        %v1337 = vadd.f32 0.0, %v1336
        %v1338 = vpop.f32.mrf.mxu0
        %v1339 = vpop.f32.mrf.mxu0
        %v1340 = vadd.f32 0.0, %v1339
        %v1341 = vpop.f32.mrf.mxu0
        %1342 = vmatprep.mubr.bf16.mxu0 0
        %1343 = vmatmul.mubr.bf16.gmra.mxu0 %v1208
        %v1344 = vpop.f32.mrf.mxu0
        %v1345 = vadd.f32 0.0, %v1344
        %v1346 = vpop.f32.mrf.mxu0
        %v1347 = vpop.f32.mrf.mxu0
        %v1348 = vadd.f32 0.0, %v1347
        %v1349 = vpop.f32.mrf.mxu0
        %1350 = vmatprep.mubr.bf16.mxu0 0
        %1351 = vmatmul.mubr.bf16.gmra.mxu0 %v1210
        %v1352 = vpop.f32.mrf.mxu0
        %v1353 = vadd.f32 0.0, %v1352
        %v1354 = vpop.f32.mrf.mxu0
        %v1355 = vpop.f32.mrf.mxu0
        %v1356 = vadd.f32 0.0, %v1355
        %v1357 = vpop.f32.mrf.mxu0
        %1358 = vmatprep.mubr.bf16.mxu0 0
        %1359 = vmatmul.mubr.bf16.gmra.mxu0 %v1212
        %v1360 = vpop.f32.mrf.mxu0
        %v1361 = vadd.f32 0.0, %v1360
        %v1362 = vpop.f32.mrf.mxu0
        %v1363 = vpop.f32.mrf.mxu0
        %v1364 = vadd.f32 0.0, %v1363
        %v1365 = vpop.f32.mrf.mxu0
        %1366 = vmatprep.mubr.bf16.mxu0 0
        %1367 = vmatmul.mubr.bf16.gmra.mxu0 %v1214
        %v1368 = vpop.f32.mrf.mxu0
        %v1369 = vadd.f32 0.0, %v1368
        %v1370 = vpop.f32.mrf.mxu0
        %v1371 = vpop.f32.mrf.mxu0
        %v1372 = vadd.f32 0.0, %v1371
        %v1373 = vpop.f32.mrf.mxu0
        %1374 = vmatprep.mubr.bf16.mxu0 0
        %1375 = vmatmul.mubr.bf16.gmra.mxu0 %v1216
        %v1376 = vpop.f32.mrf.mxu0
        %v1377 = vadd.f32 0.0, %v1376
        %v1378 = vpop.f32.mrf.mxu0
        %v1379 = vpop.f32.mrf.mxu0
        %v1380 = vadd.f32 0.0, %v1379
        %v1381 = vpop.f32.mrf.mxu0
        %1382 = vdwg.mxu0
        %v1385 = vunpack.c.l.b16 %v1123
        %v1386 = vunpack.c.l.b16 %v1124
        %v1387 = vpack.c.b16 %v1386, %v1385
        %v1388 = vsel %vm1185, %v1092, 0
        %v1391 = vsel %vm1218, %v1387, 0
        %1393 = vmatprep.subr.bf16.mxu0 0
        %1394 = vmatpush1.bf16.msra.mxu0 0
        %1395 = vmatprep.subr.bf16.mxu0 0
        %1396 = vmatpush1.bf16.msra.mxu0 0
        %1397 = vmatprep.subr.bf16.mxu0 0
        %1398 = vmatpush1.bf16.msra.mxu0 0
        %1399 = vmatprep.subr.bf16.mxu0 0
        %1400 = vmatpush1.bf16.msra.mxu0 0
        %1401 = vmatprep.subr.bf16.mxu0 0
        %1402 = vmatpush1.bf16.msra.mxu0 0
        %1403 = vmatprep.subr.bf16.mxu0 0
        %1404 = vmatpush1.bf16.msra.mxu0 0
        %1405 = vmatprep.subr.bf16.mxu0 0
        %1406 = vmatpush1.bf16.msra.mxu0 0
        %1407 = vmatprep.subr.bf16.mxu0 0
        %1408 = vmatpush1.bf16.msra.mxu0 %v1391
        %1409 = vmatprep.subr.bf16.mxu0 0
        %1410 = vmatpush2.bf16.msra.mxu0 0
        %1411 = vmatprep.subr.bf16.mxu0 0
        %1412 = vmatpush2.bf16.msra.mxu0 0
        %1413 = vmatprep.subr.bf16.mxu0 0
        %1414 = vmatpush2.bf16.msra.mxu0 0
        %1415 = vmatprep.subr.bf16.mxu0 0
        %1416 = vmatpush2.bf16.msra.mxu0 0
        %1417 = vmatprep.subr.bf16.mxu0 0
        %1418 = vmatpush2.bf16.msra.mxu0 0
        %1419 = vmatprep.subr.bf16.mxu0 0
        %1420 = vmatpush2.bf16.msra.mxu0 0
        %1421 = vmatprep.subr.bf16.mxu0 0
        %1422 = vmatpush2.bf16.msra.mxu0 0
        %1423 = vmatprep.subr.bf16.mxu0 0
        %1424 = vmatpush2.bf16.msra.mxu0 0
        %1425 = vmatprep.mubr.bf16.mxu0 0
        %1426 = vmatmul.mubr.bf16.gmra.mxu0 %v1388
        %v1427 = vpop.f32.mrf.mxu0
        %v1428 = vadd.f32 %v1257, %v1427
        %v1429 = vpop.f32.mrf.mxu0
        %v1430 = vpop.f32.mrf.mxu0
        %v1431 = vadd.f32 %v1260, %v1430
        %v1432 = vpop.f32.mrf.mxu0
        %1433 = vmatprep.mubr.bf16.mxu0 0
        %1434 = vmatmul.mubr.bf16.gmra.mxu0 %v1186
        %v1435 = vpop.f32.mrf.mxu0
        %v1436 = vadd.f32 %v1265, %v1435
        %v1437 = vpop.f32.mrf.mxu0
        %v1438 = vpop.f32.mrf.mxu0
        %v1439 = vadd.f32 %v1268, %v1438
        %v1440 = vpop.f32.mrf.mxu0
        %1441 = vmatprep.mubr.bf16.mxu0 0
        %1442 = vmatmul.mubr.bf16.gmra.mxu0 %v1188
        %v1443 = vpop.f32.mrf.mxu0
        %v1444 = vadd.f32 %v1273, %v1443
        %v1445 = vpop.f32.mrf.mxu0
        %v1446 = vpop.f32.mrf.mxu0
        %v1447 = vadd.f32 %v1276, %v1446
        %v1448 = vpop.f32.mrf.mxu0
        %1449 = vmatprep.mubr.bf16.mxu0 0
        %1450 = vmatmul.mubr.bf16.gmra.mxu0 %v1190
        %v1451 = vpop.f32.mrf.mxu0
        %v1452 = vadd.f32 %v1281, %v1451
        %v1453 = vpop.f32.mrf.mxu0
        %v1454 = vpop.f32.mrf.mxu0
        %v1455 = vadd.f32 %v1284, %v1454
        %v1456 = vpop.f32.mrf.mxu0
        %1457 = vmatprep.mubr.bf16.mxu0 0
        %1458 = vmatmul.mubr.bf16.gmra.mxu0 %v1192
        %v1459 = vpop.f32.mrf.mxu0
        %v1460 = vadd.f32 %v1289, %v1459
        %v1461 = vpop.f32.mrf.mxu0
        %v1462 = vpop.f32.mrf.mxu0
        %v1463 = vadd.f32 %v1292, %v1462
        %v1464 = vpop.f32.mrf.mxu0
        %1465 = vmatprep.mubr.bf16.mxu0 0
        %1466 = vmatmul.mubr.bf16.gmra.mxu0 %v1194
        %v1467 = vpop.f32.mrf.mxu0
        %v1468 = vadd.f32 %v1297, %v1467
        %v1469 = vpop.f32.mrf.mxu0
        %v1470 = vpop.f32.mrf.mxu0
        %v1471 = vadd.f32 %v1300, %v1470
        %v1472 = vpop.f32.mrf.mxu0
        %1473 = vmatprep.mubr.bf16.mxu0 0
        %1474 = vmatmul.mubr.bf16.gmra.mxu0 %v1196
        %v1475 = vpop.f32.mrf.mxu0
        %v1476 = vadd.f32 %v1305, %v1475
        %v1477 = vpop.f32.mrf.mxu0
        %v1478 = vpop.f32.mrf.mxu0
        %v1479 = vadd.f32 %v1308, %v1478
        %v1480 = vpop.f32.mrf.mxu0
        %1481 = vmatprep.mubr.bf16.mxu0 0
        %1482 = vmatmul.mubr.bf16.gmra.mxu0 %v1198
        %v1483 = vpop.f32.mrf.mxu0
        %v1484 = vadd.f32 %v1313, %v1483
        %v1485 = vpop.f32.mrf.mxu0
        %v1486 = vpop.f32.mrf.mxu0
        %v1487 = vadd.f32 %v1316, %v1486
        %v1488 = vpop.f32.mrf.mxu0
        %1489 = vmatprep.mubr.bf16.mxu0 0
        %1490 = vmatmul.mubr.bf16.gmra.mxu0 %v1200
        %v1491 = vpop.f32.mrf.mxu0
        %v1492 = vadd.f32 %v1321, %v1491
        %v1493 = vpop.f32.mrf.mxu0
        %v1494 = vpop.f32.mrf.mxu0
        %v1495 = vadd.f32 %v1324, %v1494
        %v1496 = vpop.f32.mrf.mxu0
        %1497 = vmatprep.mubr.bf16.mxu0 0
        %1498 = vmatmul.mubr.bf16.gmra.mxu0 %v1202
        %v1499 = vpop.f32.mrf.mxu0
        %v1500 = vadd.f32 %v1329, %v1499
        %v1501 = vpop.f32.mrf.mxu0
        %v1502 = vpop.f32.mrf.mxu0
        %v1503 = vadd.f32 %v1332, %v1502
        %v1504 = vpop.f32.mrf.mxu0
        %1505 = vmatprep.mubr.bf16.mxu0 0
        %1506 = vmatmul.mubr.bf16.gmra.mxu0 %v1204
        %v1507 = vpop.f32.mrf.mxu0
        %v1508 = vadd.f32 %v1337, %v1507
        %v1509 = vpop.f32.mrf.mxu0
        %v1510 = vpop.f32.mrf.mxu0
        %v1511 = vadd.f32 %v1340, %v1510
        %v1512 = vpop.f32.mrf.mxu0
        %1513 = vmatprep.mubr.bf16.mxu0 0
        %1514 = vmatmul.mubr.bf16.gmra.mxu0 %v1206
        %v1515 = vpop.f32.mrf.mxu0
        %v1516 = vadd.f32 %v1345, %v1515
        %v1517 = vpop.f32.mrf.mxu0
        %v1518 = vpop.f32.mrf.mxu0
        %v1519 = vadd.f32 %v1348, %v1518
        %v1520 = vpop.f32.mrf.mxu0
        %1521 = vmatprep.mubr.bf16.mxu0 0
        %1522 = vmatmul.mubr.bf16.gmra.mxu0 %v1208
        %v1523 = vpop.f32.mrf.mxu0
        %v1524 = vadd.f32 %v1353, %v1523
        %v1525 = vpop.f32.mrf.mxu0
        %v1526 = vpop.f32.mrf.mxu0
        %v1527 = vadd.f32 %v1356, %v1526
        %v1528 = vpop.f32.mrf.mxu0
        %1529 = vmatprep.mubr.bf16.mxu0 0
        %1530 = vmatmul.mubr.bf16.gmra.mxu0 %v1210
        %v1531 = vpop.f32.mrf.mxu0
        %v1532 = vadd.f32 %v1361, %v1531
        %v1533 = vpop.f32.mrf.mxu0
        %v1534 = vpop.f32.mrf.mxu0
        %v1535 = vadd.f32 %v1364, %v1534
        %v1536 = vpop.f32.mrf.mxu0
        %1537 = vmatprep.mubr.bf16.mxu0 0
        %1538 = vmatmul.mubr.bf16.gmra.mxu0 %v1212
        %v1539 = vpop.f32.mrf.mxu0
        %v1540 = vadd.f32 %v1369, %v1539
        %v1541 = vpop.f32.mrf.mxu0
        %v1542 = vpop.f32.mrf.mxu0
        %v1543 = vadd.f32 %v1372, %v1542
        %v1544 = vpop.f32.mrf.mxu0
        %1545 = vmatprep.mubr.bf16.mxu0 0
        %1546 = vmatmul.mubr.bf16.gmra.mxu0 %v1214
        %v1547 = vpop.f32.mrf.mxu0
        %v1548 = vadd.f32 %v1377, %v1547
        %v1549 = vpop.f32.mrf.mxu0
        %v1550 = vpop.f32.mrf.mxu0
        %v1551 = vadd.f32 %v1380, %v1550
        %v1552 = vpop.f32.mrf.mxu0
        %1553 = vdwg.mxu0
        %v1555 = vshrl.u32 %v280, 16
        %v1557 = vrot.slane %v1555, 4
        %v1558 = vshll.u32 %v280, 16
        %v1560 = vrot.slane %v1558, 5
        %v1561 = vor.u32 %v1557, %v1560
        %v1562 = vrot.slane %v1561, 4
        %v1564 = vshll.u32 %v281, 16
        %v1566 = vrot.slane %v1564, 5
        %v1567 = vsel %vm285, %v1562, %v1566
        %v1568 = vshrl.u32 %v281, 16
        %v1570 = vrot.slane %v1568, 4
        %v1571 = vor.u32 %v1570, %v1566
        %v1572 = vrot.slane %v1571, 4
        %v1574 = vshll.u32 %v282, 16
        %v1576 = vrot.slane %v1574, 5
        %v1577 = vsel %vm285, %v1572, %v1576
        %v1581 = vrot.slane %v280, 5
        %v1582 = vrot.slane %v1581, 4
        %v1583 = vrot.slane %v281, 5
        %v1584 = vsel %vm720, %v1582, %v1583
        %v1585 = vrot.slane %v1583, 4
        %v1586 = vrot.slane %v282, 5
        %v1587 = vsel %vm720, %v1585, %v1586
        %v1588 = vunpack.c.l.b16 %v280
        %v1589 = vunpack.c.l.b16 %v281
        %v1590 = vpack.c.b16 %v1589, %v1588
        %v1591 = vunpack.c.l.b16 %v1567
        %v1592 = vunpack.c.l.b16 %v1577
        %v1593 = vpack.c.b16 %v1592, %v1591
        %1594 = vrot.lane.b32.xlu0 %v1593, 4
        %v1595 = vpop.permute.xlu0 %1594
        %v1596 = vunpack.c.l.b16 %v1584
        %v1597 = vunpack.c.l.b16 %v1587
        %v1598 = vpack.c.b16 %v1597, %v1596
        %1599 = vrot.lane.b32.xlu0 %v1598, 8
        %v1600 = vpop.permute.xlu0 %1599
        %v1603 = vsel %vm1041, %v1590, %v1595
        %v1605 = vsel %vm1090, %v1603, %v1600
        %s1606 = scalar_lea.vmem %s219, 16
        %v1607 = vld [vmem:[%s1606] sm:$0xf]
        %v1608 = vld [vmem:[%s1606 + $0x4] sm:$0x3]
        %v1611 = vunpack.c.l.b16 %v1607
        %v1612 = vunpack.c.l.b16 %v1608
        %v1613 = vpack.c.b16 %v1612, %v1611
        %v1614 = vsel %vm1185, %v1605, 0
        %v1617 = vsel %vm1218, %v1613, 0
        %1619 = vmatprep.subr.bf16.mxu0 0
        %1620 = vmatpush1.bf16.msra.mxu0 0
        %1621 = vmatprep.subr.bf16.mxu0 0
        %1622 = vmatpush1.bf16.msra.mxu0 0
        %1623 = vmatprep.subr.bf16.mxu0 0
        %1624 = vmatpush1.bf16.msra.mxu0 0
        %1625 = vmatprep.subr.bf16.mxu0 0
        %1626 = vmatpush1.bf16.msra.mxu0 0
        %1627 = vmatprep.subr.bf16.mxu0 0
        %1628 = vmatpush1.bf16.msra.mxu0 0
        %1629 = vmatprep.subr.bf16.mxu0 0
        %1630 = vmatpush1.bf16.msra.mxu0 0
        %1631 = vmatprep.subr.bf16.mxu0 0
        %1632 = vmatpush1.bf16.msra.mxu0 0
        %1633 = vmatprep.subr.bf16.mxu0 0
        %1634 = vmatpush1.bf16.msra.mxu0 %v1617
        %1635 = vmatprep.subr.bf16.mxu0 0
        %1636 = vmatpush2.bf16.msra.mxu0 0
        %1637 = vmatprep.subr.bf16.mxu0 0
        %1638 = vmatpush2.bf16.msra.mxu0 0
        %1639 = vmatprep.subr.bf16.mxu0 0
        %1640 = vmatpush2.bf16.msra.mxu0 0
        %1641 = vmatprep.subr.bf16.mxu0 0
        %1642 = vmatpush2.bf16.msra.mxu0 0
        %1643 = vmatprep.subr.bf16.mxu0 0
        %1644 = vmatpush2.bf16.msra.mxu0 0
        %1645 = vmatprep.subr.bf16.mxu0 0
        %1646 = vmatpush2.bf16.msra.mxu0 0
        %1647 = vmatprep.subr.bf16.mxu0 0
        %1648 = vmatpush2.bf16.msra.mxu0 0
        %1649 = vmatprep.subr.bf16.mxu0 0
        %1650 = vmatpush2.bf16.msra.mxu0 0
        %1651 = vmatprep.mubr.bf16.mxu0 0
        %1652 = vmatmul.mubr.bf16.gmra.mxu0 %v1188
        %v1653 = vpop.f32.mrf.mxu0
        %v1654 = vadd.f32 0.0, %v1653
        %v1655 = vpop.f32.mrf.mxu0
        %v1656 = vpop.f32.mrf.mxu0
        %v1657 = vadd.f32 0.0, %v1656
        %v1658 = vpop.f32.mrf.mxu0
        %1659 = vmatprep.mubr.bf16.mxu0 0
        %1660 = vmatmul.mubr.bf16.gmra.mxu0 %v1190
        %v1661 = vpop.f32.mrf.mxu0
        %v1662 = vadd.f32 0.0, %v1661
        %v1663 = vpop.f32.mrf.mxu0
        %v1664 = vpop.f32.mrf.mxu0
        %v1665 = vadd.f32 0.0, %v1664
        %v1666 = vpop.f32.mrf.mxu0
        %1667 = vmatprep.mubr.bf16.mxu0 0
        %1668 = vmatmul.mubr.bf16.gmra.mxu0 %v1192
        %v1669 = vpop.f32.mrf.mxu0
        %v1670 = vadd.f32 0.0, %v1669
        %v1671 = vpop.f32.mrf.mxu0
        %v1672 = vpop.f32.mrf.mxu0
        %v1673 = vadd.f32 0.0, %v1672
        %v1674 = vpop.f32.mrf.mxu0
        %1675 = vmatprep.mubr.bf16.mxu0 0
        %1676 = vmatmul.mubr.bf16.gmra.mxu0 %v1194
        %v1677 = vpop.f32.mrf.mxu0
        %v1678 = vadd.f32 0.0, %v1677
        %v1679 = vpop.f32.mrf.mxu0
        %v1680 = vpop.f32.mrf.mxu0
        %v1681 = vadd.f32 0.0, %v1680
        %v1682 = vpop.f32.mrf.mxu0
        %1683 = vmatprep.mubr.bf16.mxu0 0
        %1684 = vmatmul.mubr.bf16.gmra.mxu0 %v1196
        %v1685 = vpop.f32.mrf.mxu0
        %v1686 = vadd.f32 0.0, %v1685
        %v1687 = vpop.f32.mrf.mxu0
        %v1688 = vpop.f32.mrf.mxu0
        %v1689 = vadd.f32 0.0, %v1688
        %v1690 = vpop.f32.mrf.mxu0
        %1691 = vmatprep.mubr.bf16.mxu0 0
        %1692 = vmatmul.mubr.bf16.gmra.mxu0 %v1198
        %v1693 = vpop.f32.mrf.mxu0
        %v1694 = vadd.f32 0.0, %v1693
        %v1695 = vpop.f32.mrf.mxu0
        %v1696 = vpop.f32.mrf.mxu0
        %v1697 = vadd.f32 0.0, %v1696
        %v1698 = vpop.f32.mrf.mxu0
        %1699 = vmatprep.mubr.bf16.mxu0 0
        %1700 = vmatmul.mubr.bf16.gmra.mxu0 %v1200
        %v1701 = vpop.f32.mrf.mxu0
        %v1702 = vadd.f32 0.0, %v1701
        %v1703 = vpop.f32.mrf.mxu0
        %v1704 = vpop.f32.mrf.mxu0
        %v1705 = vadd.f32 0.0, %v1704
        %v1706 = vpop.f32.mrf.mxu0
        %1707 = vmatprep.mubr.bf16.mxu0 0
        %1708 = vmatmul.mubr.bf16.gmra.mxu0 %v1202
        %v1709 = vpop.f32.mrf.mxu0
        %v1710 = vadd.f32 0.0, %v1709
        %v1711 = vpop.f32.mrf.mxu0
        %v1712 = vpop.f32.mrf.mxu0
        %v1713 = vadd.f32 0.0, %v1712
        %v1714 = vpop.f32.mrf.mxu0
        %1715 = vmatprep.mubr.bf16.mxu0 0
        %1716 = vmatmul.mubr.bf16.gmra.mxu0 %v1204
        %v1717 = vpop.f32.mrf.mxu0
        %v1718 = vadd.f32 0.0, %v1717
        %v1719 = vpop.f32.mrf.mxu0
        %v1720 = vpop.f32.mrf.mxu0
        %v1721 = vadd.f32 0.0, %v1720
        %v1722 = vpop.f32.mrf.mxu0
        %1723 = vmatprep.mubr.bf16.mxu0 0
        %1724 = vmatmul.mubr.bf16.gmra.mxu0 %v1206
        %v1725 = vpop.f32.mrf.mxu0
        %v1726 = vadd.f32 0.0, %v1725
        %v1727 = vpop.f32.mrf.mxu0
        %v1728 = vpop.f32.mrf.mxu0
        %v1729 = vadd.f32 0.0, %v1728
        %v1730 = vpop.f32.mrf.mxu0
        %1731 = vmatprep.mubr.bf16.mxu0 0
        %1732 = vmatmul.mubr.bf16.gmra.mxu0 %v1208
        %v1733 = vpop.f32.mrf.mxu0
        %v1734 = vadd.f32 0.0, %v1733
        %v1735 = vpop.f32.mrf.mxu0
        %v1736 = vpop.f32.mrf.mxu0
        %v1737 = vadd.f32 0.0, %v1736
        %v1738 = vpop.f32.mrf.mxu0
        %1739 = vmatprep.mubr.bf16.mxu0 0
        %1740 = vmatmul.mubr.bf16.gmra.mxu0 %v1210
        %v1741 = vpop.f32.mrf.mxu0
        %v1742 = vadd.f32 0.0, %v1741
        %v1743 = vpop.f32.mrf.mxu0
        %v1744 = vpop.f32.mrf.mxu0
        %v1745 = vadd.f32 0.0, %v1744
        %v1746 = vpop.f32.mrf.mxu0
        %1747 = vmatprep.mubr.bf16.mxu0 0
        %1748 = vmatmul.mubr.bf16.gmra.mxu0 %v1212
        %v1749 = vpop.f32.mrf.mxu0
        %v1750 = vadd.f32 0.0, %v1749
        %v1751 = vpop.f32.mrf.mxu0
        %v1752 = vpop.f32.mrf.mxu0
        %v1753 = vadd.f32 0.0, %v1752
        %v1754 = vpop.f32.mrf.mxu0
        %1755 = vmatprep.mubr.bf16.mxu0 0
        %1756 = vmatmul.mubr.bf16.gmra.mxu0 %v1214
        %v1757 = vpop.f32.mrf.mxu0
        %v1758 = vadd.f32 0.0, %v1757
        %v1759 = vpop.f32.mrf.mxu0
        %v1760 = vpop.f32.mrf.mxu0
        %v1761 = vadd.f32 0.0, %v1760
        %v1762 = vpop.f32.mrf.mxu0
        %1763 = vmatprep.mubr.bf16.mxu0 0
        %1764 = vmatmul.mubr.bf16.gmra.mxu0 %v1216
        %v1765 = vpop.f32.mrf.mxu0
        %v1766 = vadd.f32 0.0, %v1765
        %v1767 = vpop.f32.mrf.mxu0
        %v1768 = vpop.f32.mrf.mxu0
        %v1769 = vadd.f32 0.0, %v1768
        %v1770 = vpop.f32.mrf.mxu0
        %1771 = vmatprep.mubr.bf16.mxu0 0
        %1772 = vmatmul.mubr.bf16.gmra.mxu0 %v1614
        %v1773 = vpop.f32.mrf.mxu0
        %v1774 = vadd.f32 0.0, %v1773
        %v1775 = vpop.f32.mrf.mxu0
        %v1776 = vpop.f32.mrf.mxu0
        %v1777 = vadd.f32 0.0, %v1776
        %v1778 = vpop.f32.mrf.mxu0
        %1779 = vdwg.mxu0
        %v1780 = vadd.f32 %v1428, %v1654
        %v1781 = vadd.f32 %v1431, %v1657
        %v1782 = vadd.f32 %v1436, %v1662
        %v1783 = vadd.f32 %v1439, %v1665
        %v1784 = vadd.f32 %v1444, %v1670
        %v1785 = vadd.f32 %v1447, %v1673
        %v1786 = vadd.f32 %v1452, %v1678
        %v1787 = vadd.f32 %v1455, %v1681
        %v1788 = vadd.f32 %v1460, %v1686
        %v1789 = vadd.f32 %v1463, %v1689
        %v1790 = vadd.f32 %v1468, %v1694
        %v1791 = vadd.f32 %v1471, %v1697
        %v1792 = vadd.f32 %v1476, %v1702
        %v1793 = vadd.f32 %v1479, %v1705
        %v1794 = vadd.f32 %v1484, %v1710
        %v1795 = vadd.f32 %v1487, %v1713
        %v1796 = vadd.f32 %v1492, %v1718
        %v1797 = vadd.f32 %v1495, %v1721
        %v1798 = vadd.f32 %v1500, %v1726
        %v1799 = vadd.f32 %v1503, %v1729
        %v1800 = vadd.f32 %v1508, %v1734
        %v1801 = vadd.f32 %v1511, %v1737
        %v1802 = vadd.f32 %v1516, %v1742
        %v1803 = vadd.f32 %v1519, %v1745
        %v1804 = vadd.f32 %v1524, %v1750
        %v1805 = vadd.f32 %v1527, %v1753
        %v1806 = vadd.f32 %v1532, %v1758
        %v1807 = vadd.f32 %v1535, %v1761
        %v1808 = vadd.f32 %v1540, %v1766
        %v1809 = vadd.f32 %v1543, %v1769
        %v1810 = vadd.f32 %v1548, %v1774
        %v1811 = vadd.f32 %v1551, %v1777
        %v1812 = vld [vmem:[%s222] sm:$0x1]
        %v1814 = vlaneseq
        %v1815 = vshrl.u32 %v1814, 7
        %v1816 = vsub.s32 0, %v1815
        %v1817 = vrot.slane %v1812, %v1816
        %v1819 = vadd.f32 %v1780, %v1817
        %v1820 = vadd.f32 %v1781, %v1817
        %v1821 = vadd.f32 %v1782, %v1817
        %v1822 = vadd.f32 %v1783, %v1817
        %v1823 = vadd.f32 %v1784, %v1817
        %v1824 = vadd.f32 %v1785, %v1817
        %v1825 = vadd.f32 %v1786, %v1817
        %v1826 = vadd.f32 %v1787, %v1817
        %v1827 = vadd.f32 %v1788, %v1817
        %v1828 = vadd.f32 %v1789, %v1817
        %v1829 = vadd.f32 %v1790, %v1817
        %v1830 = vadd.f32 %v1791, %v1817
        %v1831 = vadd.f32 %v1792, %v1817
        %v1832 = vadd.f32 %v1793, %v1817
        %v1833 = vadd.f32 %v1794, %v1817
        %v1834 = vadd.f32 %v1795, %v1817
        %v1835 = vadd.f32 %v1796, %v1817
        %v1836 = vadd.f32 %v1797, %v1817
        %v1837 = vadd.f32 %v1798, %v1817
        %v1838 = vadd.f32 %v1799, %v1817
        %v1839 = vadd.f32 %v1800, %v1817
        %v1840 = vadd.f32 %v1801, %v1817
        %v1841 = vadd.f32 %v1802, %v1817
        %v1842 = vadd.f32 %v1803, %v1817
        %v1843 = vadd.f32 %v1804, %v1817
        %v1844 = vadd.f32 %v1805, %v1817
        %v1845 = vadd.f32 %v1806, %v1817
        %v1846 = vadd.f32 %v1807, %v1817
        %v1847 = vadd.f32 %v1808, %v1817
        %v1848 = vadd.f32 %v1809, %v1817
        %v1849 = vadd.f32 %v1810, %v1817
        %v1850 = vadd.f32 %v1811, %v1817
        %vm1851 = vcmp.gt.f32.partialorder %v1819, 0.0
        %vm1852 = vcmp.gt.f32.partialorder %v1820, 0.0
        %vm1853 = vcmp.gt.f32.partialorder %v1821, 0.0
        %vm1854 = vcmp.gt.f32.partialorder %v1822, 0.0
        %vm1855 = vcmp.gt.f32.partialorder %v1823, 0.0
        %vm1856 = vcmp.gt.f32.partialorder %v1824, 0.0
        %vm1857 = vcmp.gt.f32.partialorder %v1825, 0.0
        %vm1858 = vcmp.gt.f32.partialorder %v1826, 0.0
        %vm1859 = vcmp.gt.f32.partialorder %v1827, 0.0
        %vm1860 = vcmp.gt.f32.partialorder %v1828, 0.0
        %vm1861 = vcmp.gt.f32.partialorder %v1829, 0.0
        %vm1862 = vcmp.gt.f32.partialorder %v1830, 0.0
        %vm1863 = vcmp.gt.f32.partialorder %v1831, 0.0
        %vm1864 = vcmp.gt.f32.partialorder %v1832, 0.0
        %vm1865 = vcmp.gt.f32.partialorder %v1833, 0.0
        %vm1866 = vcmp.gt.f32.partialorder %v1834, 0.0
        %vm1867 = vcmp.gt.f32.partialorder %v1835, 0.0
        %vm1868 = vcmp.gt.f32.partialorder %v1836, 0.0
        %vm1869 = vcmp.gt.f32.partialorder %v1837, 0.0
        %vm1870 = vcmp.gt.f32.partialorder %v1838, 0.0
        %vm1871 = vcmp.gt.f32.partialorder %v1839, 0.0
        %vm1872 = vcmp.gt.f32.partialorder %v1840, 0.0
        %vm1873 = vcmp.gt.f32.partialorder %v1841, 0.0
        %vm1874 = vcmp.gt.f32.partialorder %v1842, 0.0
        %vm1875 = vcmp.gt.f32.partialorder %v1843, 0.0
        %vm1876 = vcmp.gt.f32.partialorder %v1844, 0.0
        %vm1877 = vcmp.gt.f32.partialorder %v1845, 0.0
        %vm1878 = vcmp.gt.f32.partialorder %v1846, 0.0
        %vm1879 = vcmp.gt.f32.partialorder %v1847, 0.0
        %vm1880 = vcmp.gt.f32.partialorder %v1848, 0.0
        %vm1881 = vcmp.gt.f32.partialorder %v1849, 0.0
        %vm1882 = vcmp.gt.f32.partialorder %v1850, 0.0
        %v1883 = vmul.f32 %v1819, 0.1
        %v1884 = vmul.f32 %v1820, 0.1
        %v1885 = vmul.f32 %v1821, 0.1
        %v1886 = vmul.f32 %v1822, 0.1
        %v1887 = vmul.f32 %v1823, 0.1
        %v1888 = vmul.f32 %v1824, 0.1
        %v1889 = vmul.f32 %v1825, 0.1
        %v1890 = vmul.f32 %v1826, 0.1
        %v1891 = vmul.f32 %v1827, 0.1
        %v1892 = vmul.f32 %v1828, 0.1
        %v1893 = vmul.f32 %v1829, 0.1
        %v1894 = vmul.f32 %v1830, 0.1
        %v1895 = vmul.f32 %v1831, 0.1
        %v1896 = vmul.f32 %v1832, 0.1
        %v1897 = vmul.f32 %v1833, 0.1
        %v1898 = vmul.f32 %v1834, 0.1
        %v1899 = vmul.f32 %v1835, 0.1
        %v1900 = vmul.f32 %v1836, 0.1
        %v1901 = vmul.f32 %v1837, 0.1
        %v1902 = vmul.f32 %v1838, 0.1
        %v1903 = vmul.f32 %v1839, 0.1
        %v1904 = vmul.f32 %v1840, 0.1
        %v1905 = vmul.f32 %v1841, 0.1
        %v1906 = vmul.f32 %v1842, 0.1
        %v1907 = vmul.f32 %v1843, 0.1
        %v1908 = vmul.f32 %v1844, 0.1
        %v1909 = vmul.f32 %v1845, 0.1
        %v1910 = vmul.f32 %v1846, 0.1
        %v1911 = vmul.f32 %v1847, 0.1
        %v1912 = vmul.f32 %v1848, 0.1
        %v1913 = vmul.f32 %v1849, 0.1
        %v1914 = vmul.f32 %v1850, 0.1
        %v1915 = vsel %vm1851, %v1819, %v1883
        %v1916 = vsel %vm1852, %v1820, %v1884
        %v1917 = vsel %vm1853, %v1821, %v1885
        %v1918 = vsel %vm1854, %v1822, %v1886
        %v1919 = vsel %vm1855, %v1823, %v1887
        %v1920 = vsel %vm1856, %v1824, %v1888
        %v1921 = vsel %vm1857, %v1825, %v1889
        %v1922 = vsel %vm1858, %v1826, %v1890
        %v1923 = vsel %vm1859, %v1827, %v1891
        %v1924 = vsel %vm1860, %v1828, %v1892
        %v1925 = vsel %vm1861, %v1829, %v1893
        %v1926 = vsel %vm1862, %v1830, %v1894
        %v1927 = vsel %vm1863, %v1831, %v1895
        %v1928 = vsel %vm1864, %v1832, %v1896
        %v1929 = vsel %vm1865, %v1833, %v1897
        %v1930 = vsel %vm1866, %v1834, %v1898
        %v1931 = vsel %vm1867, %v1835, %v1899
        %v1932 = vsel %vm1868, %v1836, %v1900
        %v1933 = vsel %vm1869, %v1837, %v1901
        %v1934 = vsel %vm1870, %v1838, %v1902
        %v1935 = vsel %vm1871, %v1839, %v1903
        %v1936 = vsel %vm1872, %v1840, %v1904
        %v1937 = vsel %vm1873, %v1841, %v1905
        %v1938 = vsel %vm1874, %v1842, %v1906
        %v1939 = vsel %vm1875, %v1843, %v1907
        %v1940 = vsel %vm1876, %v1844, %v1908
        %v1941 = vsel %vm1877, %v1845, %v1909
        %v1942 = vsel %vm1878, %v1846, %v1910
        %v1943 = vsel %vm1879, %v1847, %v1911
        %v1944 = vsel %vm1880, %v1848, %v1912
        %v1945 = vsel %vm1881, %v1849, %v1913
        %v1946 = vsel %vm1882, %v1850, %v1914
        %1947 = vst [vmem:[%s210] sm:$0xff] %v1915
        %1948 = vst [vmem:[%s210 + $0x8] sm:$0xff] %v1916
        %1949 = vst [vmem:[%s210 + $0x10] sm:$0xff] %v1917
        %1950 = vst [vmem:[%s210 + $0x18] sm:$0xff] %v1918
        %1951 = vst [vmem:[%s210 + $0x20] sm:$0xff] %v1919
        %1952 = vst [vmem:[%s210 + $0x28] sm:$0xff] %v1920
        %1953 = vst [vmem:[%s210 + $0x30] sm:$0xff] %v1921
        %1954 = vst [vmem:[%s210 + $0x38] sm:$0xff] %v1922
        %1955 = vst [vmem:[%s210 + $0x40] sm:$0xff] %v1923
        %1956 = vst [vmem:[%s210 + $0x48] sm:$0xff] %v1924
        %1957 = vst [vmem:[%s210 + $0x50] sm:$0xff] %v1925
        %1958 = vst [vmem:[%s210 + $0x58] sm:$0xff] %v1926
        %1959 = vst [vmem:[%s210 + $0x60] sm:$0xff] %v1927
        %1960 = vst [vmem:[%s210 + $0x68] sm:$0xff] %v1928
        %1961 = vst [vmem:[%s210 + $0x70] sm:$0xff] %v1929
        %1962 = vst [vmem:[%s210 + $0x78] sm:$0xff] %v1930
        %1963 = vst [vmem:[%s210 + $0x80] sm:$0xff] %v1931
        %1964 = vst [vmem:[%s210 + $0x88] sm:$0xff] %v1932
        %1965 = vst [vmem:[%s210 + $0x90] sm:$0xff] %v1933
        %1966 = vst [vmem:[%s210 + $0x98] sm:$0xff] %v1934
        %1967 = vst [vmem:[%s210 + $0xa0] sm:$0xff] %v1935
        %1968 = vst [vmem:[%s210 + $0xa8] sm:$0xff] %v1936
        %1969 = vst [vmem:[%s210 + $0xb0] sm:$0xff] %v1937
        %1970 = vst [vmem:[%s210 + $0xb8] sm:$0xff] %v1938
        %1971 = vst [vmem:[%s210 + $0xc0] sm:$0xff] %v1939
        %1972 = vst [vmem:[%s210 + $0xc8] sm:$0xff] %v1940
        %1973 = vst [vmem:[%s210 + $0xd0] sm:$0xff] %v1941
        %1974 = vst [vmem:[%s210 + $0xd8] sm:$0xff] %v1942
        %1975 = vst [vmem:[%s210 + $0xe0] sm:$0xff] %v1943
        %1976 = vst [vmem:[%s210 + $0xe8] sm:$0xff] %v1944
        %1977 = vst [vmem:[%s210 + $0xf0] sm:$0xff] %v1945
        %1978 = vst [vmem:[%s210 + $0xf8] sm:$0xff] %v1946
        %s1979 = sand.u32 %s126, 1
        %s1980 = scalar_lea.sflag [#allocation3], %s1979
        %s1981 = sand.u32 %s126, 1
        %s1982 = smul.addr %s1981, 256
        %s1983 = scalar_lea.vmem [#allocation2], %s1982
        // Predicated region
        $region33: #{tpu_custom_call.1} parent=31 // pred_check
          %p1984 = pneg %p136
        $region34: #{tpu_custom_call.1} parent=31 // pred_check_branch
          %1986 = sbr.rel (%p1984) target = $region36
        $region35: #{tpu_custom_call.1} parent=31 // pred_region
          %s1987 = smul.u32 16, %s23
          %s1989 = ssub.s32 4096, 4096
          %1990 = vsyncadd %s1980, %s1989
          %s1991 = smul.addr %s1987, 2
          %s1992 = sadd.s32 %s24, %s1991
          %s1993 = smul.addr %s22, 32
          %s1994 = sadd.s32 %s1992, %s1993
          %s1995 = smul.addr %s1994, 128
          %s1996 = scalar_lea.hbm %s3, %s1995
          %s1997 = sshll.u32 %s1983, 4
          %s1998 = int_to_ptr.vmem [resolvable:$true] %s1997
          %2003 = dma.vmem_to_hbm [thread:$0]  %s1998, 4096, %s1996, %s1980, 128, 128, 8
        $region36: #{tpu_custom_call.1} parent=31 // pred_fallthru
          _
      $region32: #{tpu_custom_call.1} parent=5 // pred_fallthru
        _
      %p2004 = scmp.le.s32.totalorder 2, %s12
      // Predicated region
      $region37: #{tpu_custom_call.1} parent=5 // pred_check
        %p2005 = pneg %p2004
      $region38: #{tpu_custom_call.1} parent=5 // pred_check_branch
        %2007 = sbr.rel (%p2005) target = $region40
      $region39: #{tpu_custom_call.1} parent=5 // pred_region
        %s2008 = ssub.s32 %s12, 2
        // Predicated region
        $region41: #{tpu_custom_call.1} parent=39 // pred_check
          %p2009 = pneg %p142
        $region42: #{tpu_custom_call.1} parent=39 // pred_check_branch
          %2011 = sbr.rel (%p2009) target = $region44
        $region43: #{tpu_custom_call.1} parent=39 // pred_region
          %s2012 = sand.u32 %s127, 1
          %s2013 = scalar_lea.sflag [#allocation3], %s2012
          %s2014 = sand.u32 %s127, 1
          %s2015 = smul.addr %s2014, 256
          %s2016 = scalar_lea.vmem [#allocation2], %s2015
          %2017 = dma.done %s2013, 4096
        $region44: #{tpu_custom_call.1} parent=39 // pred_fallthru
          _
      $region40: #{tpu_custom_call.1} parent=5 // pred_fallthru
        _
    $region6: #{tpu_custom_call.1} parent=1 // loop_footer
      %s16 = sadd.s32 1, %s12
    $region7: #{tpu_custom_call.1} parent=1 // loop_footer_branch
      %11 = sbr.rel target = $region3
    $region8: #{tpu_custom_call.1} parent=1 // loop_exit
      _
    %2018 = vsyncpa [#allocation3], 1
    %s2019 = scalar_lea.sflag [#allocation3], 1
    %2020 = vsyncpa %s2019, 1

</llo_original>
